<compile_context>
chip_gen: v7x
topology: tpu7x:2x2x1
jax: 0.10.0
libtpu: 0.0.40
codegen_flags: <defaults>
</compile_context>

<pallas_src>
import functools

import jax
import jax.numpy as jnp
from jax.experimental import pallas as pl
from jax.experimental.pallas import tpu as pltpu


# ----------------------------------------------------------------------------- kernels

def _fused_lora_linear_kernel_nok(x_ref, wt_ref, xd_ref, ut_ref, b_ref, o_ref):
    """Single-shot (no reduction grid axis): out = x @ Wt + xd @ Ut + b."""
    main = jnp.dot(x_ref[...], wt_ref[...], preferred_element_type=jnp.float32)
    lora = jnp.dot(xd_ref[...], ut_ref[...], preferred_element_type=jnp.float32)
    o_ref[...] = (main + lora + b_ref[...]).astype(o_ref.dtype)


def _fused_lora_linear_kernel_k(x_ref, wt_ref, xd_ref, ut_ref, b_ref, o_ref, acc_ref):
    """K-tiled: accumulate x @ Wt over k; epilogue adds LoRA + bias directly to o_ref."""
    k = pl.program_id(2)
    nk = pl.num_programs(2)

    partial = jnp.dot(x_ref[...], wt_ref[...], preferred_element_type=jnp.float32)

    @pl.when(k == 0)
    def _():
        acc_ref[...] = jnp.zeros_like(acc_ref)

    @pl.when(k < nk - 1)
    def _():
        acc_ref[...] += partial

    @pl.when(k == nk - 1)
    def _():
        # Final partial is NOT stored to acc_ref first -> saves a (tm,tn) f32
        # store + reload per output tile.  LoRA scale & bias already folded in.
        lora = jnp.dot(xd_ref[...], ut_ref[...], preferred_element_type=jnp.float32)
        o_ref[...] = (acc_ref[...] + partial + lora + b_ref[...]).astype(o_ref.dtype)


# ----------------------------------------------------------------------------- helpers

def _round_up(x, m):
    return ((x + m - 1) // m) * m


def _pick_tile(dim, pref):
    """Largest divisor of dim that is <= pref, preferring 256-multiples (full
    v6e/v7x MXU passes), falling back to 128-multiples.  `dim` is always a
    multiple of 128 (padded at param prep), so a valid tile always exists."""
    if dim <= pref:
        return dim
    for step in (256, 128):
        t = (pref // step) * step
        while t >= step:
            if dim % t == 0:
                return t
            t -= step
    return dim


# ------------------------------------------------------------------ parameter preparation
# One-time relayout (parameter-load time, NOT per forward): avoids materializing a
# transposed copy of the weight in HBM on every call.

_LORA_PAD = 128  # lane-dense LoRA width


def prepare_column_parallel_linear_params(weight, lora_down, lora_up, bias, *,
                                           lora_alpha, lora_rank):
    """weight: (N, K); lora_down: (r, K); lora_up: (N, r); bias: (N,) or None."""
    N, K = weight.shape
    r = lora_down.shape[0]
    assert lora_up.shape == (N, r)
    assert r <= _LORA_PAD, "LoRA rank > 128 not supported by this kernel"

    Kp = _round_up(max(K, 128), 128)
    Np = _round_up(max(N, 128), 128)

    lora_scale = float(lora_alpha) / float(lora_rank)

    # Weight stored (K, N): direct MXU feed, lane-dense output, no per-call transpose.
    wt = jnp.zeros((Kp, Np), dtype=weight.dtype).at[:K, :N].set(weight.T)
    # LoRA down stored (K, 128): xd = x @ dt is lane-dense (no 8-wide vregs).
    dt = jnp.zeros((Kp, _LORA_PAD), dtype=lora_down.dtype).at[:K, :r].set(lora_down.T)
    # LoRA up stored (128, N) with alpha/rank folded in (one-time scale).
    ut_scaled = (lora_up.astype(jnp.float32).T * lora_scale).astype(lora_up.dtype)
    ut = jnp.zeros((_LORA_PAD, Np), dtype=lora_up.dtype).at[:r, :N].set(ut_scaled)
    # Bias as a f32 row (zeros if absent).
    b2 = jnp.zeros((1, Np), dtype=jnp.float32)
    if bias is not None:
        b2 = b2.at[0, :N].set(bias.astype(jnp.float32))

    return {"wt": wt, "dt": dt, "ut": ut, "b2": b2,
            "N": N, "K": K, "Np": Np, "Kp": Kp}


# ----------------------------------------------------------------------------- forward

def column_parallel_linear_forward(x, params, *,
                                   tm_max=1024, tn_pref=1024, tk_pref=512,
                                   vmem_budget_bytes=44 * 1024 * 1024):
    """x: (..., K).  `params` from prepare_column_parallel_linear_params."""
    N, K, Np, Kp = params["N"], params["K"], params["Np"], params["Kp"]
    wt, dt, ut, b2 = params["wt"], params["dt"], params["ut"], params["b2"]
    LR = _LORA_PAD

    orig_shape = x.shape
    assert orig_shape[-1] == K
    out_dtype = x.dtype

    x2d = x.reshape(-1, K)
    M = x2d.shape[0]
    if M == 0:  # empty batch guard
        return jnp.zeros((*orig_shape[:-1], N), dtype=out_dtype)

    # Pad the contraction dim only if K is not a 128-multiple (rare; zero rows in wt
    # make the extra columns inert).
    if Kp != K:
        x2d = jnp.pad(x2d, ((0, 0), (0, Kp - K)))

    # Row tiling: cap tm, pad rows up to a tile multiple.
    tm = _round_up(M, 8) if M <= tm_max else tm_max
    Mp = _round_up(M, tm)
    if Mp != M:
        x2d = jnp.pad(x2d, ((0, Mp - M), (0, 0)))

    # LoRA down-projection computed ONCE (Mp x 128, lane-dense), not per column tile.
    xd = jnp.dot(x2d, dt, preferred_element_type=jnp.float32).astype(x2d.dtype)

    # Column tiling.
    tn = _pick_tile(Np, tn_pref)
    if Mp // tm == 1 and Np // tn < 2 and Np >= 256:
        # Decode-sized M: expose >= 2 column blocks so both v7x TensorCores work.
        tn = _pick_tile(Np, max(128, Np // 2))

    in_isize = x2d.dtype.itemsize
    w_isize = wt.dtype.itemsize
    out_isize = jnp.dtype(out_dtype).itemsize

    def nok_bytes(tn_):  # working set for the k-collapsed kernel
        return (2 * tm * Kp * in_isize + 2 * Kp * tn_ * w_isize
                + 2 * tm * LR * in_isize + 2 * LR * tn_ * w_isize
                + 2 * tn_ * 4 + 2 * tm * tn_ * out_isize)

    def k_bytes(tk_, tn_):  # working set for the k-tiled kernel (weight 3-buffered)
        return (2 * tm * tk_ * in_isize + 3 * tk_ * tn_ * w_isize
                + 2 * tm * LR * in_isize + 2 * LR * tn_ * w_isize
                + 2 * tn_ * 4 + 2 * tm * tn_ * out_isize + tm * tn_ * 4)

    use_k_axis = nok_bytes(tn) > vmem_budget_bytes
    if not use_k_axis:
        tk = Kp
    else:
        tk = _pick_tile(Kp, tk_pref)
        while k_bytes(tk, tn) > vmem_budget_bytes and tk > 256:
            tk = _pick_tile(Kp, tk // 2)
        while k_bytes(tk, tn) > vmem_budget_bytes and tn > 256:
            tn = _pick_tile(Np, tn // 2)

    grid_m, grid_n = Mp // tm, Np // tn

    cost = pl.CostEstimate(
        flops=2 * Mp * Np * Kp + 2 * Mp * Np * LR,
        transcendentals=0,
        bytes_accessed=(Mp * Kp + Kp * Np + Mp * LR + LR * Np) * in_isize
        + Np * 4 + Mp * Np * out_isize,
    )

    if not use_k_axis:
        vmem_bytes = nok_bytes(tn)
        grid = (grid_m, grid_n)
        in_specs = [
            pl.BlockSpec((tm, Kp), lambda i, j: (i, 0)),   # x
            pl.BlockSpec((Kp, tn), lambda i, j: (0, j)),   # weight (K, N)
            pl.BlockSpec((tm, LR), lambda i, j: (i, 0)),   # xd = x @ lora_down^T
            pl.BlockSpec((LR, tn), lambda i, j: (0, j)),   # scaled lora_up^T
            pl.BlockSpec((1, tn), lambda i, j: (0, j)),    # bias (f32)
        ]
        out_spec = pl.BlockSpec((tm, tn), lambda i, j: (i, j))
        scratch = []
        kernel = _fused_lora_linear_kernel_nok
        dims = ("parallel", "parallel")
    else:
        vmem_bytes = k_bytes(tk, tn)
        grid = (grid_m, grid_n, Kp // tk)
        in_specs = [
            pl.BlockSpec((tm, tk), lambda i, j, k: (i, k)),                                   # x
            pl.BlockSpec((tk, tn), lambda i, j, k: (k, j), pipeline_mode=pl.Buffered(3)),     # weight
            pl.BlockSpec((tm, LR), lambda i, j, k: (i, 0)),                                   # xd
            pl.BlockSpec((LR, tn), lambda i, j, k: (0, j)),                                   # lora_up^T
            pl.BlockSpec((1, tn), lambda i, j, k: (0, j)),                                    # bias
        ]
        out_spec = pl.BlockSpec((tm, tn), lambda i, j, k: (i, j))
        scratch = [pltpu.VMEM((tm, tn), jnp.float32)]  # f32 accumulator
        kernel = _fused_lora_linear_kernel_k
        dims = ("parallel", "parallel", "arbitrary")

    # ~1.4x fudge on the explicit working-set estimate, capped well under v7x's
    # 64 MiB physical VMEM.
    vmem_limit = int(min(max(1.4 * vmem_bytes + (4 << 20), 16 << 20), 56 << 20))

    out = pl.pallas_call(
        kernel,
        out_shape=jax.ShapeDtypeStruct((Mp, Np), out_dtype),
        grid_spec=pltpu.PrefetchScalarGridSpec(
            num_scalar_prefetch=0,
            grid=grid,
            in_specs=in_specs,
            out_specs=out_spec,
            scratch_shapes=scratch),
        compiler_params=pltpu.CompilerParams(
            dimension_semantics=dims,
            vmem_limit_bytes=vmem_limit),
        cost_estimate=cost,
    )(x2d, wt, xd, ut, b2)

    out = out[:M, :N]
    return out.reshape(*orig_shape[:-1], N)


# ----------------------------------------------------------------------------- test

if __name__ == "__main__":
    # Module config (world_size = 1 => part_out_features == out_features).
    batch, seq = 2, 8
    in_features = 1024
    out_features = 1024
    lora_rank = 8
    lora_alpha = 16
    lora_scale = lora_alpha / lora_rank
    # lora_dropout = 0.0 -> dropout is identity in forward

    key = jax.random.PRNGKey(0)
    kx, kw, kd, ku, kb, kx2 = jax.random.split(key, 6)

    x = jax.random.normal(kx, (batch, seq, in_features), dtype=jnp.float32).astype(jnp.bfloat16)
    # Deterministic synthetic parameters (bf16 weight => element_size() > 1 path).
    weight = (jax.random.normal(kw, (out_features, in_features), dtype=jnp.float32)
              * 0.02).astype(jnp.bfloat16)
    lora_down = (jax.random.normal(kd, (lora_rank, in_features), dtype=jnp.float32)
                 * 0.1).astype(jnp.bfloat16)
    # NOTE: real __init__ zeros lora_up; random init used so the LoRA path is exercised.
    lora_up = (jax.random.normal(ku, (out_features, lora_rank), dtype=jnp.float32)
               * 0.1).astype(jnp.bfloat16)
    bias = (jax.random.normal(kb, (out_features,), dtype=jnp.float32) * 0.01).astype(jnp.bfloat16)

    # One-time parameter relayout (load time, not per forward).
    params = prepare_column_parallel_linear_params(
        weight, lora_down, lora_up, bias, lora_alpha=lora_alpha, lora_rank=lora_rank)

    def ref_fwd(xin):
        xf = xin.astype(jnp.float32)
        y = xf @ weight.astype(jnp.float32).T
        lo = (xf @ lora_down.astype(jnp.float32).T) @ lora_up.astype(jnp.float32).T
        return y + lora_scale * lo + bias.astype(jnp.float32)

    # --- Test 1: prefill-shaped input (k-collapsed kernel path) ---------------
    y = column_parallel_linear_forward(x, params)
    y = jax.block_until_ready(y)
    assert y.shape == (batch, seq, out_features)
    assert jnp.allclose(y.astype(jnp.float32), ref_fwd(x), atol=0.5, rtol=5e-2), \
        "mismatch vs reference (no-k path)"

    # --- Test 2: decode-shaped input, force the k-tiled kernel path -----------
    x_dec = jax.random.normal(kx2, (3, in_features), dtype=jnp.float32).astype(jnp.bfloat16)
    y2 = column_parallel_linear_forward(x_dec, params, vmem_budget_bytes=1 << 20)
    y2 = jax.block_until_ready(y2)
    assert y2.shape == (3, out_features)
    assert jnp.allclose(y2.astype(jnp.float32), ref_fwd(x_dec), atol=0.5, rtol=5e-2), \
        "mismatch vs reference (k-tiled path)"

    print("KERNEL_OK")
</pallas_src>

<mosaic_0001>
module attributes {stable_mosaic.version = 11 : i64} {
  func.func @_fused_lora_linear_kernel_nok(%arg0: i32, %arg1: i32, %arg2: memref<16x1024xbf16, #tpu.memory_space<vmem>>, %arg3: memref<1024x512xbf16, #tpu.memory_space<vmem>>, %arg4: memref<16x128xbf16, #tpu.memory_space<vmem>>, %arg5: memref<128x512xbf16, #tpu.memory_space<vmem>>, %arg6: memref<1x512xf32, #tpu.memory_space<vmem>>, %arg7: memref<16x512xbf16, #tpu.memory_space<vmem>>) attributes {dimension_semantics = [#tpu.dimension_semantics<parallel>, #tpu.dimension_semantics<parallel>], iteration_bounds = array<i64: 1, 2>, scalar_prefetch = 0 : i64, scratch_operands = 0 : i64, tpu.core_type = #tpu.core_type<tc>, window_params = [{transform_indices = @transform_0, window_bounds = array<i64: 16, 1024>}, {transform_indices = @transform_1, window_bounds = array<i64: 1024, 512>}, {transform_indices = @transform_2, window_bounds = array<i64: 16, 128>}, {transform_indices = @transform_3, window_bounds = array<i64: 128, 512>}, {transform_indices = @transform_4, window_bounds = array<i64: 1, 512>}, {transform_indices = @transform_5, window_bounds = array<i64: 16, 512>}]} {
    %c0 = arith.constant 0 : index
    %c0_0 = arith.constant 0 : index
    %0 = vector.load %arg2[%c0, %c0_0] : memref<16x1024xbf16, #tpu.memory_space<vmem>>, vector<16x1024xbf16>
    %c0_1 = arith.constant 0 : index
    %c0_2 = arith.constant 0 : index
    %1 = vector.load %arg3[%c0_1, %c0_2] : memref<1024x512xbf16, #tpu.memory_space<vmem>>, vector<1024x512xbf16>
    %cst = arith.constant dense<0.000000e+00> : vector<16x512xf32>
    %2 = tpu.matmul %0, %1, %cst {dimension_numbers = #tpu.dot_dimension_numbers<[1], [0], [0], [1], [0, 0, 1, 1], [], []>} : vector<16x1024xbf16>, vector<1024x512xbf16>, vector<16x512xf32> -> vector<16x512xf32>
    %c0_3 = arith.constant 0 : index
    %c0_4 = arith.constant 0 : index
    %3 = vector.load %arg4[%c0_3, %c0_4] : memref<16x128xbf16, #tpu.memory_space<vmem>>, vector<16x128xbf16>
    %c0_5 = arith.constant 0 : index
    %c0_6 = arith.constant 0 : index
    %4 = vector.load %arg5[%c0_5, %c0_6] : memref<128x512xbf16, #tpu.memory_space<vmem>>, vector<128x512xbf16>
    %cst_7 = arith.constant dense<0.000000e+00> : vector<16x512xf32>
    %5 = tpu.matmul %3, %4, %cst_7 {dimension_numbers = #tpu.dot_dimension_numbers<[1], [0], [0], [1], [0, 0, 1, 1], [], []>} : vector<16x128xbf16>, vector<128x512xbf16>, vector<16x512xf32> -> vector<16x512xf32>
    %6 = arith.addf %2, %5 : vector<16x512xf32>
    %c0_8 = arith.constant 0 : index
    %c0_9 = arith.constant 0 : index
    %7 = vector.load %arg6[%c0_8, %c0_9] : memref<1x512xf32, #tpu.memory_space<vmem>>, vector<1x512xf32>
    %8 = vector.broadcast %7 : vector<1x512xf32> to vector<16x512xf32>
    %9 = arith.addf %6, %8 : vector<16x512xf32>
    %10 = arith.truncf %9 : vector<16x512xf32> to vector<16x512xbf16>
    %c0_10 = arith.constant 0 : index
    %c0_11 = arith.constant 0 : index
    %11 = vector.load %arg7[%c0_10, %c0_11] : memref<16x512xbf16, #tpu.memory_space<vmem>>, vector<16x512xbf16>
    tpu.vector_store %arg7[%c0_10, %c0_11], %10 {strides = array<i32>} : memref<16x512xbf16, #tpu.memory_space<vmem>>, vector<16x512xbf16>,
    return
  }
  func.func @transform_0(%arg0: i32, %arg1: i32) -> (i32, i32) {
    %c0_i32 = arith.constant 0 : i32
    %c0_i32_0 = arith.constant 0 : i32
    return %arg0, %c0_i32 : i32, i32
  }
  func.func @transform_1(%arg0: i32, %arg1: i32) -> (i32, i32) {
    %c0_i32 = arith.constant 0 : i32
    %c0_i32_0 = arith.constant 0 : i32
    return %c0_i32, %arg1 : i32, i32
  }
  func.func @transform_2(%arg0: i32, %arg1: i32) -> (i32, i32) {
    %c0_i32 = arith.constant 0 : i32
    %c0_i32_0 = arith.constant 0 : i32
    return %arg0, %c0_i32 : i32, i32
  }
  func.func @transform_3(%arg0: i32, %arg1: i32) -> (i32, i32) {
    %c0_i32 = arith.constant 0 : i32
    %c0_i32_0 = arith.constant 0 : i32
    return %c0_i32, %arg1 : i32, i32
  }
  func.func @transform_4(%arg0: i32, %arg1: i32) -> (i32, i32) {
    %c0_i32 = arith.constant 0 : i32
    %c0_i32_0 = arith.constant 0 : i32
    return %c0_i32, %arg1 : i32, i32
  }
  func.func @transform_5(%arg0: i32, %arg1: i32) -> (i32, i32) {
    %c0_i32 = arith.constant 0 : i32
    return %arg0, %arg1 : i32, i32
  }
}

</mosaic_0001>

<llo_original>
// kernel: tpu_custom_call.1
$region0: #{tpu_custom_call.1}
  #allocation0 [shape = 'u32[]', space=smem, size = 0x4, offset = 0x4, fixed_abs, tag = 'smem constant byte address 0x4 - core index']
  #allocation1 [shape = 'u32[144,128]{1,0:T(1,128)}', space=vmem, size = 0x12000, scoped, tag = 'internal scratch']
  %s0 = inlined_call_operand.hbm [shape: bf16[16,1024], index: 0, kind: input, shape index: {}]
  %s1 = inlined_call_operand.hbm [shape: bf16[1024,1024], index: 1, kind: input, shape index: {}]
  %s2 = inlined_call_operand.hbm [shape: bf16[16,128], index: 2, kind: input, shape index: {}]
  %s3 = inlined_call_operand.hbm [shape: bf16[128,1024], index: 3, kind: input, shape index: {}]
  %s4 = inlined_call_operand.hbm [shape: f32[1,1024], index: 4, kind: input, shape index: {}]
  %s5 = inlined_call_operand.hbm [shape: bf16[16,1024], index: 5, kind: output, shape index: {}]
  %s6 = sld [smem:[#allocation0]]
  $region73: #{tpu_custom_call.1} parent=0
    _
  %s8 = ssub.s32 1, %s6
  %s9 = scalar_select 0, %s8, %s6
  $region1: #{tpu_custom_call.1} parent=0
    #allocation2 [shape = 'u8[32768]{0}', space=vmem, size = 0x8000, scoped, tag = 'input window, operand 0, single buffered']
    #allocation3 [shape = 's32[2]{0}', space=sflag, size = 0x8, scoped, tag = 'scoped memory for tpu_custom_call.1']
    #allocation4 [shape = 's32[2]{0}', space=sflag, size = 0x8, scoped, tag = 'scoped memory for tpu_custom_call.1']
    #allocation5 [shape = 'u8[2097152]{0}', space=vmem, size = 0x200000, scoped, tag = 'input window, operand 1']
    #allocation6 [shape = 's32[2]{0}', space=sflag, size = 0x8, scoped, tag = 'scoped memory for tpu_custom_call.1']
    #allocation7 [shape = 'u8[4096]{0}', space=vmem, size = 0x1000, scoped, tag = 'input window, operand 2, single buffered']
    #allocation8 [shape = 'u8[262144]{0}', space=vmem, size = 0x40000, scoped, tag = 'input window, operand 3']
    #allocation9 [shape = 's32[2]{0}', space=sflag, size = 0x8, scoped, tag = 'scoped memory for tpu_custom_call.1']
    #allocation10 [shape = 'u8[4096]{0}', space=vmem, size = 0x1000, scoped, tag = 'input window, operand 4']
    #allocation11 [shape = 'u8[32768]{0}', space=vmem, size = 0x8000, scoped, tag = 'output window, operand 0']
    %10 = vsyncpa [#allocation3], 0
    %11 = vsyncpa [#allocation6], 0
    %s12 = scalar_lea.sflag [#allocation6], 1
    %13 = vsyncpa %s12, 0
    %14 = vsyncpa [#allocation9], 0
    %s15 = scalar_lea.sflag [#allocation9], 1
    %16 = vsyncpa %s15, 0
    %17 = vsyncpa [#allocation4], 0
    %s18 = scalar_lea.sflag [#allocation4], 1
    %19 = vsyncpa %s18, 0
    loop: start=0, step=1, limit=4
    $region2: #{tpu_custom_call.1} parent=1 // loop_pre_header
      _
    $region3: #{tpu_custom_call.1} parent=1 // loop_header
      %s21 = sphi 0, %s25
      %p22 = scmp.ge.s32.totalorder %s21, 4
      %s28 = sphi 0, %s40
      %s29 = sphi 0, %s36
      %s30 = sphi 0, %s28
      %s31 = sphi 0, %s29
      %s32 = sphi 0, %s30
      %s33 = sphi 0, %s31
      %s43 = sphi 0, %s45
      %s46 = sphi 0, %s43
      %s47 = sphi 0, %s46
      %s63 = sphi 0, %s47
      %s69 = sphi 0, %s71
      %s72 = sphi 0, %s69
      %s73 = sphi 0, %s72
      %s89 = sphi 0, %s73
      %s95 = sphi 0, %s97
      %s98 = sphi 0, %s95
      %s99 = sphi 0, %s98
      %s115 = sphi 0, %s99
      %s121 = sphi 0, %s123
      %s124 = sphi 0, %s121
      %s125 = sphi 0, %s124
      %s141 = sphi 0, %s125
      %s147 = sphi 0, %s149
      %s150 = sphi 0, %s147
      %s151 = sphi 0, %s150
      %s167 = sphi 0, %s151
      %s175 = sphi 0, %s177
      %s178 = sphi 0, %s175
      %s179 = sphi 0, %s178
      %s195 = sphi 0, %s179
    $region4: #{tpu_custom_call.1} parent=1 // loop_header_branch
      %24 = sbr.rel (%p22) target = $region8
    $region5: #{tpu_custom_call.1} parent=1 // loop_body
      %s26 = ssub.s32 %s21, 1
      %s27 = ssub.s32 %s21, 2
      %s34 = sadd.s32 1, %s29
      %p35 = scmp.ge.s32.totalorder %s34, 2
      %s36 = scalar_select %p35, 0, %s34
      %s37 = sadd.s32 1, %s28
      %s38 = scalar_select %p35, %s37, %s28
      %p39 = scmp.ge.s32.totalorder %s38, 1
      %s40 = scalar_select %p39, 0, %s38
      %s41 = ssub.s32 %s28, %s40
      %p42 = scmp.eq.s32.totalorder %s41, 0
      %s44 = sadd.s32 %s43, 1
      %s45 = scalar_select %p42, %s43, %s44
      %p48 = pneg %p42
      %p49 = scmp.eq.s32.totalorder %s21, 1
      %p50 = por %p48, %p49
      %p51 = scmp.ne.s32.totalorder %s43, %s46
      %p52 = scmp.eq.s32.totalorder %s21, 0
      %p53 = por %p51, %p52
      %p54 = scmp.ne.s32.totalorder %s43, %s46
      %p55 = scmp.eq.s32.totalorder %s26, 1
      %p56 = por %p54, %p55
      %p57 = scmp.ne.s32.totalorder %s46, %s47
      %p58 = scmp.eq.s32.totalorder %s26, 0
      %p59 = por %p57, %p58
      %p60 = scmp.ne.s32.totalorder %s46, %s47
      %p61 = scmp.eq.s32.totalorder %s27, 1
      %p62 = por %p60, %p61
      %p64 = scmp.ne.s32.totalorder %s47, %s63
      %p65 = scmp.eq.s32.totalorder %s27, 0
      %p66 = por %p64, %p65
      %s67 = ssub.s32 %s29, %s36
      %p68 = scmp.eq.s32.totalorder %s67, 0
      %s70 = sadd.s32 %s69, 1
      %s71 = scalar_select %p68, %s69, %s70
      %p74 = pneg %p68
      %p75 = scmp.eq.s32.totalorder %s21, 1
      %p76 = por %p74, %p75
      %p77 = scmp.ne.s32.totalorder %s69, %s72
      %p78 = scmp.eq.s32.totalorder %s21, 0
      %p79 = por %p77, %p78
      %p80 = scmp.ne.s32.totalorder %s69, %s72
      %p81 = scmp.eq.s32.totalorder %s26, 1
      %p82 = por %p80, %p81
      %p83 = scmp.ne.s32.totalorder %s72, %s73
      %p84 = scmp.eq.s32.totalorder %s26, 0
      %p85 = por %p83, %p84
      %p86 = scmp.ne.s32.totalorder %s72, %s73
      %p87 = scmp.eq.s32.totalorder %s27, 1
      %p88 = por %p86, %p87
      %p90 = scmp.ne.s32.totalorder %s73, %s89
      %p91 = scmp.eq.s32.totalorder %s27, 0
      %p92 = por %p90, %p91
      %s93 = ssub.s32 %s28, %s40
      %p94 = scmp.eq.s32.totalorder %s93, 0
      %s96 = sadd.s32 %s95, 1
      %s97 = scalar_select %p94, %s95, %s96
      %p100 = pneg %p94
      %p101 = scmp.eq.s32.totalorder %s21, 1
      %p102 = por %p100, %p101
      %p103 = scmp.ne.s32.totalorder %s95, %s98
      %p104 = scmp.eq.s32.totalorder %s21, 0
      %p105 = por %p103, %p104
      %p106 = scmp.ne.s32.totalorder %s95, %s98
      %p107 = scmp.eq.s32.totalorder %s26, 1
      %p108 = por %p106, %p107
      %p109 = scmp.ne.s32.totalorder %s98, %s99
      %p110 = scmp.eq.s32.totalorder %s26, 0
      %p111 = por %p109, %p110
      %p112 = scmp.ne.s32.totalorder %s98, %s99
      %p113 = scmp.eq.s32.totalorder %s27, 1
      %p114 = por %p112, %p113
      %p116 = scmp.ne.s32.totalorder %s99, %s115
      %p117 = scmp.eq.s32.totalorder %s27, 0
      %p118 = por %p116, %p117
      %s119 = ssub.s32 %s29, %s36
      %p120 = scmp.eq.s32.totalorder %s119, 0
      %s122 = sadd.s32 %s121, 1
      %s123 = scalar_select %p120, %s121, %s122
      %p126 = pneg %p120
      %p127 = scmp.eq.s32.totalorder %s21, 1
      %p128 = por %p126, %p127
      %p129 = scmp.ne.s32.totalorder %s121, %s124
      %p130 = scmp.eq.s32.totalorder %s21, 0
      %p131 = por %p129, %p130
      %p132 = scmp.ne.s32.totalorder %s121, %s124
      %p133 = scmp.eq.s32.totalorder %s26, 1
      %p134 = por %p132, %p133
      %p135 = scmp.ne.s32.totalorder %s124, %s125
      %p136 = scmp.eq.s32.totalorder %s26, 0
      %p137 = por %p135, %p136
      %p138 = scmp.ne.s32.totalorder %s124, %s125
      %p139 = scmp.eq.s32.totalorder %s27, 1
      %p140 = por %p138, %p139
      %p142 = scmp.ne.s32.totalorder %s125, %s141
      %p143 = scmp.eq.s32.totalorder %s27, 0
      %p144 = por %p142, %p143
      %s145 = ssub.s32 %s29, %s36
      %p146 = scmp.eq.s32.totalorder %s145, 0
      %s148 = sadd.s32 %s147, 1
      %s149 = scalar_select %p146, %s147, %s148
      %p152 = pneg %p146
      %p153 = scmp.eq.s32.totalorder %s21, 1
      %p154 = por %p152, %p153
      %p155 = scmp.ne.s32.totalorder %s147, %s150
      %p156 = scmp.eq.s32.totalorder %s21, 0
      %p157 = por %p155, %p156
      %p158 = scmp.ne.s32.totalorder %s147, %s150
      %p159 = scmp.eq.s32.totalorder %s26, 1
      %p160 = por %p158, %p159
      %p161 = scmp.ne.s32.totalorder %s150, %s151
      %p162 = scmp.eq.s32.totalorder %s26, 0
      %p163 = por %p161, %p162
      %p164 = scmp.ne.s32.totalorder %s150, %s151
      %p165 = scmp.eq.s32.totalorder %s27, 1
      %p166 = por %p164, %p165
      %p168 = scmp.ne.s32.totalorder %s151, %s167
      %p169 = scmp.eq.s32.totalorder %s27, 0
      %p170 = por %p168, %p169
      %s171 = ssub.s32 %s28, %s40
      %s172 = ssub.s32 %s29, %s36
      %s173 = sor.u32 %s171, %s172
      %p174 = scmp.eq.s32.totalorder %s173, 0
      %s176 = sadd.s32 %s175, 1
      %s177 = scalar_select %p174, %s175, %s176
      %p180 = pneg %p174
      %p181 = scmp.eq.s32.totalorder %s21, 1
      %p182 = por %p180, %p181
      %p183 = scmp.ne.s32.totalorder %s175, %s178
      %p184 = scmp.eq.s32.totalorder %s21, 0
      %p185 = por %p183, %p184
      %p186 = scmp.ne.s32.totalorder %s175, %s178
      %p187 = scmp.eq.s32.totalorder %s26, 1
      %p188 = por %p186, %p187
      %p189 = scmp.ne.s32.totalorder %s178, %s179
      %p190 = scmp.eq.s32.totalorder %s26, 0
      %p191 = por %p189, %p190
      %p192 = scmp.ne.s32.totalorder %s178, %s179
      %p193 = scmp.eq.s32.totalorder %s27, 1
      %p194 = por %p192, %p193
      %p196 = scmp.ne.s32.totalorder %s179, %s195
      %p197 = scmp.eq.s32.totalorder %s27, 0
      %p198 = por %p196, %p197
      %p199 = scmp.le.s32.totalorder 1, %s21
      %p200 = scmp.lt.s32.totalorder %s21, 3
      %p201 = pnand %p199, %p200
      %p202 = pneg %p201
      // Predicated region
      $region9: #{tpu_custom_call.1} parent=5 // pred_check
        _
      $region10: #{tpu_custom_call.1} parent=5 // pred_check_branch
        %204 = sbr.rel (%p201) target = $region12
      $region11: #{tpu_custom_call.1} parent=5 // pred_region
        %s205 = ssub.s32 %s21, 1
        // Predicated region
        $region13: #{tpu_custom_call.1} parent=11 // pred_check
          %p206 = pneg %p59
        $region14: #{tpu_custom_call.1} parent=11 // pred_check_branch
          %208 = sbr.rel (%p206) target = $region16
        $region15: #{tpu_custom_call.1} parent=11 // pred_region
          %s209 = smul.u32 2, %s30
          %s211 = ssub.s32 1024, 1024
          %212 = vsyncadd [#allocation3], %s211
          %s213 = smul.addr %s209, 8
          %s214 = smul.addr %s213, 64
          %s215 = scalar_lea.hbm %s0, %s214
          %s216 = sshll.u32 [#allocation2], 4
          %s217 = int_to_ptr.vmem [resolvable:$true] %s216
          %222 = dma.hbm_to_vmem [thread:$0]  %s215, 1024, %s217, [#allocation3], 512, 512, 32
        $region16: #{tpu_custom_call.1} parent=11 // pred_fallthru
          _
        // Predicated region
        $region17: #{tpu_custom_call.1} parent=11 // pred_check
          %p223 = pneg %p111
        $region18: #{tpu_custom_call.1} parent=11 // pred_check_branch
          %225 = sbr.rel (%p223) target = $region20
        $region19: #{tpu_custom_call.1} parent=11 // pred_region
          %s226 = smul.u32 2, %s30
          %s228 = ssub.s32 128, 128
          %229 = vsyncadd [#allocation6], %s228
          %s230 = smul.addr %s226, 64
          %s231 = scalar_lea.hbm %s2, %s230
          %s232 = sshll.u32 [#allocation7], 4
          %s233 = int_to_ptr.vmem [resolvable:$true] %s232
          %238 = dma.hbm_to_vmem [thread:$0]  %s231, 128, %s233, [#allocation6], 64, 64, 4
        $region20: #{tpu_custom_call.1} parent=11 // pred_fallthru
          _
      $region12: #{tpu_custom_call.1} parent=5 // pred_fallthru
        _
      %p239 = scmp.lt.s32.totalorder %s21, 2
      // Predicated region
      $region21: #{tpu_custom_call.1} parent=5 // pred_check
        %p240 = pneg %p239
      $region22: #{tpu_custom_call.1} parent=5 // pred_check_branch
        %242 = sbr.rel (%p240) target = $region24
      $region23: #{tpu_custom_call.1} parent=5 // pred_region
        // Predicated region
        $region25: #{tpu_custom_call.1} parent=23 // pred_check
          %p243 = pneg %p79
        $region26: #{tpu_custom_call.1} parent=23 // pred_check_branch
          %245 = sbr.rel (%p243) target = $region28
        $region27: #{tpu_custom_call.1} parent=23 // pred_region
          %s246 = sand.u32 %s21, 1
          %s247 = scalar_lea.sflag [#allocation6], %s246
          %s248 = sand.u32 %s69, 1
          %s249 = smul.addr %s248, 2048
          %s250 = scalar_lea.vmem [#allocation5], %s249
          %s251 = smul.u32 4, %s29
          %s253 = ssub.s32 32768, 32768
          %254 = vsyncadd %s247, %s253
          %s255 = smul.addr %s251, 64
          %s256 = scalar_lea.hbm %s1, %s255
          %s257 = sshll.u32 %s250, 4
          %s258 = int_to_ptr.vmem [resolvable:$true] %s257
          %263 = dma.hbm_to_vmem [thread:$0]  %s256, 32768, %s258, %s247, 512, 256, 16
        $region28: #{tpu_custom_call.1} parent=23 // pred_fallthru
          _
        // Predicated region
        $region29: #{tpu_custom_call.1} parent=23 // pred_check
          %p264 = pneg %p131
        $region30: #{tpu_custom_call.1} parent=23 // pred_check_branch
          %266 = sbr.rel (%p264) target = $region32
        $region31: #{tpu_custom_call.1} parent=23 // pred_region
          %s267 = sand.u32 %s21, 1
          %s268 = scalar_lea.sflag [#allocation9], %s267
          %s269 = sand.u32 %s121, 1
          %s270 = smul.addr %s269, 256
          %s271 = scalar_lea.vmem [#allocation8], %s270
          %s272 = smul.u32 4, %s29
          %s274 = ssub.s32 4096, 4096
          %275 = vsyncadd %s268, %s274
          %s276 = smul.addr %s272, 64
          %s277 = scalar_lea.hbm %s3, %s276
          %s278 = sshll.u32 %s271, 4
          %s279 = int_to_ptr.vmem [resolvable:$true] %s278
          %284 = dma.hbm_to_vmem [thread:$0]  %s277, 4096, %s279, %s268, 512, 256, 16
        $region32: #{tpu_custom_call.1} parent=23 // pred_fallthru
          _
        // Predicated region
        $region33: #{tpu_custom_call.1} parent=23 // pred_check
          %p285 = pneg %p157
        $region34: #{tpu_custom_call.1} parent=23 // pred_check_branch
          %287 = sbr.rel (%p285) target = $region36
        $region35: #{tpu_custom_call.1} parent=23 // pred_region
          %s288 = sand.u32 %s21, 1
          %s289 = scalar_lea.sflag [#allocation9], %s288
          %s290 = sand.u32 %s147, 1
          %s291 = smul.addr %s290, 4
          %s292 = scalar_lea.vmem [#allocation10], %s291
          %s293 = smul.u32 4, %s29
          %s295 = ssub.s32 64, 64
          %296 = vsyncadd %s289, %s295
          %s297 = smul.addr %s293, 16
          %s298 = scalar_lea.hbm %s4, %s297
          %s300 = sshll.u32 %s292, 4
          %s301 = int_to_ptr.vmem [resolvable:$true] %s300
          %303 = dma.hbm_to_vmem [thread:$0]  %s298, 64, %s301, %s289
        $region36: #{tpu_custom_call.1} parent=23 // pred_fallthru
          _
      $region24: #{tpu_custom_call.1} parent=5 // pred_fallthru
        _
      %p304 = scmp.le.s32.totalorder 1, %s21
      %p305 = scmp.lt.s32.totalorder %s21, 3
      %p306 = pnand %p304, %p305
      %p307 = pneg %p306
      // Predicated region
      $region37: #{tpu_custom_call.1} parent=5 // pred_check
        _
      $region38: #{tpu_custom_call.1} parent=5 // pred_check_branch
        %309 = sbr.rel (%p306) target = $region40
      $region39: #{tpu_custom_call.1} parent=5 // pred_region
        %s310 = ssub.s32 %s21, 1
        // Predicated region
        $region41: #{tpu_custom_call.1} parent=39 // pred_check
          %p311 = pneg %p59
        $region42: #{tpu_custom_call.1} parent=39 // pred_check_branch
          %313 = sbr.rel (%p311) target = $region44
        $region43: #{tpu_custom_call.1} parent=39 // pred_region
          %314 = dma.done [#allocation3], 1024
        $region44: #{tpu_custom_call.1} parent=39 // pred_fallthru
          _
        %s315 = sand.u32 %s26, 1
        %s316 = scalar_lea.sflag [#allocation6], %s315
        %s317 = sand.u32 %s72, 1
        %s318 = smul.addr %s317, 2048
        %s319 = scalar_lea.vmem [#allocation5], %s318
        // Predicated region
        $region45: #{tpu_custom_call.1} parent=39 // pred_check
          %p320 = pneg %p85
        $region46: #{tpu_custom_call.1} parent=39 // pred_check_branch
          %322 = sbr.rel (%p320) target = $region48
        $region47: #{tpu_custom_call.1} parent=39 // pred_region
          %323 = dma.done %s316, 32768
        $region48: #{tpu_custom_call.1} parent=39 // pred_fallthru
          _
        // Predicated region
        $region49: #{tpu_custom_call.1} parent=39 // pred_check
          %p324 = pneg %p111
        $region50: #{tpu_custom_call.1} parent=39 // pred_check_branch
          %326 = sbr.rel (%p324) target = $region52
        $region51: #{tpu_custom_call.1} parent=39 // pred_region
          %327 = dma.done [#allocation6], 128
        $region52: #{tpu_custom_call.1} parent=39 // pred_fallthru
          _
        %s328 = sand.u32 %s26, 1
        %s329 = scalar_lea.sflag [#allocation9], %s328
        %s330 = sand.u32 %s124, 1
        %s331 = smul.addr %s330, 256
        %s332 = scalar_lea.vmem [#allocation8], %s331
        // Predicated region
        $region53: #{tpu_custom_call.1} parent=39 // pred_check
          %p333 = pneg %p137
        $region54: #{tpu_custom_call.1} parent=39 // pred_check_branch
          %335 = sbr.rel (%p333) target = $region56
        $region55: #{tpu_custom_call.1} parent=39 // pred_region
          %336 = dma.done %s329, 4096
        $region56: #{tpu_custom_call.1} parent=39 // pred_fallthru
          _
        %s337 = sand.u32 %s26, 1
        %s338 = scalar_lea.sflag [#allocation9], %s337
        %s339 = sand.u32 %s150, 1
        %s340 = smul.addr %s339, 4
        %s341 = scalar_lea.vmem [#allocation10], %s340
        // Predicated region
        $region57: #{tpu_custom_call.1} parent=39 // pred_check
          %p342 = pneg %p163
        $region58: #{tpu_custom_call.1} parent=39 // pred_check_branch
          %344 = sbr.rel (%p342) target = $region60
        $region59: #{tpu_custom_call.1} parent=39 // pred_region
          %345 = dma.done %s338, 64
        $region60: #{tpu_custom_call.1} parent=39 // pred_fallthru
          _
        %p346 = pneg %p59
        %p347 = pneg %p56
        %s348 = sand.u32 %s26, 1
        %s349 = scalar_lea.sflag [#allocation6], %s348
        %s350 = sand.u32 %s72, 1
        %s351 = smul.addr %s350, 2048
        %s352 = scalar_lea.vmem [#allocation5], %s351
        %p353 = pneg %p85
        %p354 = pneg %p82
        %p355 = pneg %p111
        %p356 = pneg %p108
        %s357 = sand.u32 %s26, 1
        %s358 = scalar_lea.sflag [#allocation9], %s357
        %s359 = sand.u32 %s124, 1
        %s360 = smul.addr %s359, 256
        %s361 = scalar_lea.vmem [#allocation8], %s360
        %p362 = pneg %p137
        %p363 = pneg %p134
        %s364 = sand.u32 %s26, 1
        %s365 = scalar_lea.sflag [#allocation9], %s364
        %s366 = sand.u32 %s150, 1
        %s367 = smul.addr %s366, 4
        %s368 = scalar_lea.vmem [#allocation10], %s367
        %p369 = pneg %p163
        %p370 = pneg %p160
        %p371 = pneg %p191
        %p372 = pneg %p188
        %s373 = sand.u32 %s178, 1
        %s374 = scalar_lea.sflag [#allocation4], %s373
        %s375 = sand.u32 %s178, 1
        %s376 = smul.addr %s375, 32
        %s377 = scalar_lea.vmem [#allocation11], %s376
        %s378 = smul.u32 2, %s30
        %s379 = smul.u32 4, %s31
        %s380 = smul.u32 2, %s30
        %s381 = smul.u32 4, %s31
        %s382 = smul.u32 4, %s31
        %s383 = smul.u32 2, %s30
        %s384 = smul.u32 4, %s31
        %v386 = vld [vmem:[#allocation2] sm:$0xff]
        %v387 = vld [vmem:[#allocation2 + $0x8] sm:$0xff]
        %v388 = vld [vmem:[#allocation2 + $0x10] sm:$0xff]
        %v389 = vld [vmem:[#allocation2 + $0x18] sm:$0xff]
        %v390 = vld [vmem:[#allocation2 + $0x20] sm:$0xff]
        %v391 = vld [vmem:[#allocation2 + $0x28] sm:$0xff]
        %v392 = vld [vmem:[#allocation2 + $0x30] sm:$0xff]
        %v393 = vld [vmem:[#allocation2 + $0x38] sm:$0xff]
        %v394 = vld [vmem:[%s319] sm:$0xff]
        %v395 = vld [vmem:[%s319 + $0x8] sm:$0xff]
        %v396 = vld [vmem:[%s319 + $0x10] sm:$0xff]
        %v397 = vld [vmem:[%s319 + $0x18] sm:$0xff]
        %v398 = vld [vmem:[%s319 + $0x20] sm:$0xff]
        %v399 = vld [vmem:[%s319 + $0x28] sm:$0xff]
        %v400 = vld [vmem:[%s319 + $0x30] sm:$0xff]
        %v401 = vld [vmem:[%s319 + $0x38] sm:$0xff]
        %v402 = vld [vmem:[%s319 + $0x40] sm:$0xff]
        %v403 = vld [vmem:[%s319 + $0x48] sm:$0xff]
        %v404 = vld [vmem:[%s319 + $0x50] sm:$0xff]
        %v405 = vld [vmem:[%s319 + $0x58] sm:$0xff]
        %v406 = vld [vmem:[%s319 + $0x60] sm:$0xff]
        %v407 = vld [vmem:[%s319 + $0x68] sm:$0xff]
        %v408 = vld [vmem:[%s319 + $0x70] sm:$0xff]
        %v409 = vld [vmem:[%s319 + $0x78] sm:$0xff]
        %v410 = vld [vmem:[%s319 + $0x80] sm:$0xff]
        %v411 = vld [vmem:[%s319 + $0x88] sm:$0xff]
        %v412 = vld [vmem:[%s319 + $0x90] sm:$0xff]
        %v413 = vld [vmem:[%s319 + $0x98] sm:$0xff]
        %v414 = vld [vmem:[%s319 + $0xa0] sm:$0xff]
        %v415 = vld [vmem:[%s319 + $0xa8] sm:$0xff]
        %v416 = vld [vmem:[%s319 + $0xb0] sm:$0xff]
        %v417 = vld [vmem:[%s319 + $0xb8] sm:$0xff]
        %v418 = vld [vmem:[%s319 + $0xc0] sm:$0xff]
        %v419 = vld [vmem:[%s319 + $0xc8] sm:$0xff]
        %v420 = vld [vmem:[%s319 + $0xd0] sm:$0xff]
        %v421 = vld [vmem:[%s319 + $0xd8] sm:$0xff]
        %v422 = vld [vmem:[%s319 + $0xe0] sm:$0xff]
        %v423 = vld [vmem:[%s319 + $0xe8] sm:$0xff]
        %v424 = vld [vmem:[%s319 + $0xf0] sm:$0xff]
        %v425 = vld [vmem:[%s319 + $0xf8] sm:$0xff]
        %v426 = vld [vmem:[%s319 + $0x100] sm:$0xff]
        %v427 = vld [vmem:[%s319 + $0x108] sm:$0xff]
        %v428 = vld [vmem:[%s319 + $0x110] sm:$0xff]
        %v429 = vld [vmem:[%s319 + $0x118] sm:$0xff]
        %v430 = vld [vmem:[%s319 + $0x120] sm:$0xff]
        %v431 = vld [vmem:[%s319 + $0x128] sm:$0xff]
        %v432 = vld [vmem:[%s319 + $0x130] sm:$0xff]
        %v433 = vld [vmem:[%s319 + $0x138] sm:$0xff]
        %v434 = vld [vmem:[%s319 + $0x140] sm:$0xff]
        %v435 = vld [vmem:[%s319 + $0x148] sm:$0xff]
        %v436 = vld [vmem:[%s319 + $0x150] sm:$0xff]
        %v437 = vld [vmem:[%s319 + $0x158] sm:$0xff]
        %v438 = vld [vmem:[%s319 + $0x160] sm:$0xff]
        %v439 = vld [vmem:[%s319 + $0x168] sm:$0xff]
        %v440 = vld [vmem:[%s319 + $0x170] sm:$0xff]
        %v441 = vld [vmem:[%s319 + $0x178] sm:$0xff]
        %v442 = vld [vmem:[%s319 + $0x180] sm:$0xff]
        %v443 = vld [vmem:[%s319 + $0x188] sm:$0xff]
        %v444 = vld [vmem:[%s319 + $0x190] sm:$0xff]
        %v445 = vld [vmem:[%s319 + $0x198] sm:$0xff]
        %v446 = vld [vmem:[%s319 + $0x1a0] sm:$0xff]
        %v447 = vld [vmem:[%s319 + $0x1a8] sm:$0xff]
        %v448 = vld [vmem:[%s319 + $0x1b0] sm:$0xff]
        %v449 = vld [vmem:[%s319 + $0x1b8] sm:$0xff]
        %v450 = vld [vmem:[%s319 + $0x1c0] sm:$0xff]
        %v451 = vld [vmem:[%s319 + $0x1c8] sm:$0xff]
        %v452 = vld [vmem:[%s319 + $0x1d0] sm:$0xff]
        %v453 = vld [vmem:[%s319 + $0x1d8] sm:$0xff]
        %v454 = vld [vmem:[%s319 + $0x1e0] sm:$0xff]
        %v455 = vld [vmem:[%s319 + $0x1e8] sm:$0xff]
        %v456 = vld [vmem:[%s319 + $0x1f0] sm:$0xff]
        %v457 = vld [vmem:[%s319 + $0x1f8] sm:$0xff]
        %v458 = vld [vmem:[%s319 + $0x200] sm:$0xff]
        %v459 = vld [vmem:[%s319 + $0x208] sm:$0xff]
        %v460 = vld [vmem:[%s319 + $0x210] sm:$0xff]
        %v461 = vld [vmem:[%s319 + $0x218] sm:$0xff]
        %v462 = vld [vmem:[%s319 + $0x220] sm:$0xff]
        %v463 = vld [vmem:[%s319 + $0x228] sm:$0xff]
        %v464 = vld [vmem:[%s319 + $0x230] sm:$0xff]
        %v465 = vld [vmem:[%s319 + $0x238] sm:$0xff]
        %v466 = vld [vmem:[%s319 + $0x240] sm:$0xff]
        %v467 = vld [vmem:[%s319 + $0x248] sm:$0xff]
        %v468 = vld [vmem:[%s319 + $0x250] sm:$0xff]
        %v469 = vld [vmem:[%s319 + $0x258] sm:$0xff]
        %v470 = vld [vmem:[%s319 + $0x260] sm:$0xff]
        %v471 = vld [vmem:[%s319 + $0x268] sm:$0xff]
        %v472 = vld [vmem:[%s319 + $0x270] sm:$0xff]
        %v473 = vld [vmem:[%s319 + $0x278] sm:$0xff]
        %v474 = vld [vmem:[%s319 + $0x280] sm:$0xff]
        %v475 = vld [vmem:[%s319 + $0x288] sm:$0xff]
        %v476 = vld [vmem:[%s319 + $0x290] sm:$0xff]
        %v477 = vld [vmem:[%s319 + $0x298] sm:$0xff]
        %v478 = vld [vmem:[%s319 + $0x2a0] sm:$0xff]
        %v479 = vld [vmem:[%s319 + $0x2a8] sm:$0xff]
        %v480 = vld [vmem:[%s319 + $0x2b0] sm:$0xff]
        %v481 = vld [vmem:[%s319 + $0x2b8] sm:$0xff]
        %v482 = vld [vmem:[%s319 + $0x2c0] sm:$0xff]
        %v483 = vld [vmem:[%s319 + $0x2c8] sm:$0xff]
        %v484 = vld [vmem:[%s319 + $0x2d0] sm:$0xff]
        %v485 = vld [vmem:[%s319 + $0x2d8] sm:$0xff]
        %v486 = vld [vmem:[%s319 + $0x2e0] sm:$0xff]
        %v487 = vld [vmem:[%s319 + $0x2e8] sm:$0xff]
        %v488 = vld [vmem:[%s319 + $0x2f0] sm:$0xff]
        %v489 = vld [vmem:[%s319 + $0x2f8] sm:$0xff]
        %v490 = vld [vmem:[%s319 + $0x300] sm:$0xff]
        %v491 = vld [vmem:[%s319 + $0x308] sm:$0xff]
        %v492 = vld [vmem:[%s319 + $0x310] sm:$0xff]
        %v493 = vld [vmem:[%s319 + $0x318] sm:$0xff]
        %v494 = vld [vmem:[%s319 + $0x320] sm:$0xff]
        %v495 = vld [vmem:[%s319 + $0x328] sm:$0xff]
        %v496 = vld [vmem:[%s319 + $0x330] sm:$0xff]
        %v497 = vld [vmem:[%s319 + $0x338] sm:$0xff]
        %v498 = vld [vmem:[%s319 + $0x340] sm:$0xff]
        %v499 = vld [vmem:[%s319 + $0x348] sm:$0xff]
        %v500 = vld [vmem:[%s319 + $0x350] sm:$0xff]
        %v501 = vld [vmem:[%s319 + $0x358] sm:$0xff]
        %v502 = vld [vmem:[%s319 + $0x360] sm:$0xff]
        %v503 = vld [vmem:[%s319 + $0x368] sm:$0xff]
        %v504 = vld [vmem:[%s319 + $0x370] sm:$0xff]
        %v505 = vld [vmem:[%s319 + $0x378] sm:$0xff]
        %v506 = vld [vmem:[%s319 + $0x380] sm:$0xff]
        %v507 = vld [vmem:[%s319 + $0x388] sm:$0xff]
        %v508 = vld [vmem:[%s319 + $0x390] sm:$0xff]
        %v509 = vld [vmem:[%s319 + $0x398] sm:$0xff]
        %v510 = vld [vmem:[%s319 + $0x3a0] sm:$0xff]
        %v511 = vld [vmem:[%s319 + $0x3a8] sm:$0xff]
        %v512 = vld [vmem:[%s319 + $0x3b0] sm:$0xff]
        %v513 = vld [vmem:[%s319 + $0x3b8] sm:$0xff]
        %v514 = vld [vmem:[%s319 + $0x3c0] sm:$0xff]
        %v515 = vld [vmem:[%s319 + $0x3c8] sm:$0xff]
        %v516 = vld [vmem:[%s319 + $0x3d0] sm:$0xff]
        %v517 = vld [vmem:[%s319 + $0x3d8] sm:$0xff]
        %v518 = vld [vmem:[%s319 + $0x3e0] sm:$0xff]
        %v519 = vld [vmem:[%s319 + $0x3e8] sm:$0xff]
        %v520 = vld [vmem:[%s319 + $0x3f0] sm:$0xff]
        %v521 = vld [vmem:[%s319 + $0x3f8] sm:$0xff]
        %v522 = vld [vmem:[%s319 + $0x400] sm:$0xff]
        %v523 = vld [vmem:[%s319 + $0x408] sm:$0xff]
        %v524 = vld [vmem:[%s319 + $0x410] sm:$0xff]
        %v525 = vld [vmem:[%s319 + $0x418] sm:$0xff]
        %v526 = vld [vmem:[%s319 + $0x420] sm:$0xff]
        %v527 = vld [vmem:[%s319 + $0x428] sm:$0xff]
        %v528 = vld [vmem:[%s319 + $0x430] sm:$0xff]
        %v529 = vld [vmem:[%s319 + $0x438] sm:$0xff]
        %v530 = vld [vmem:[%s319 + $0x440] sm:$0xff]
        %v531 = vld [vmem:[%s319 + $0x448] sm:$0xff]
        %v532 = vld [vmem:[%s319 + $0x450] sm:$0xff]
        %v533 = vld [vmem:[%s319 + $0x458] sm:$0xff]
        %v534 = vld [vmem:[%s319 + $0x460] sm:$0xff]
        %v535 = vld [vmem:[%s319 + $0x468] sm:$0xff]
        %v536 = vld [vmem:[%s319 + $0x470] sm:$0xff]
        %v537 = vld [vmem:[%s319 + $0x478] sm:$0xff]
        %v538 = vld [vmem:[%s319 + $0x480] sm:$0xff]
        %v539 = vld [vmem:[%s319 + $0x488] sm:$0xff]
        %v540 = vld [vmem:[%s319 + $0x490] sm:$0xff]
        %v541 = vld [vmem:[%s319 + $0x498] sm:$0xff]
        %v542 = vld [vmem:[%s319 + $0x4a0] sm:$0xff]
        %v543 = vld [vmem:[%s319 + $0x4a8] sm:$0xff]
        %v544 = vld [vmem:[%s319 + $0x4b0] sm:$0xff]
        %v545 = vld [vmem:[%s319 + $0x4b8] sm:$0xff]
        %v546 = vld [vmem:[%s319 + $0x4c0] sm:$0xff]
        %v547 = vld [vmem:[%s319 + $0x4c8] sm:$0xff]
        %v548 = vld [vmem:[%s319 + $0x4d0] sm:$0xff]
        %v549 = vld [vmem:[%s319 + $0x4d8] sm:$0xff]
        %v550 = vld [vmem:[%s319 + $0x4e0] sm:$0xff]
        %v551 = vld [vmem:[%s319 + $0x4e8] sm:$0xff]
        %v552 = vld [vmem:[%s319 + $0x4f0] sm:$0xff]
        %v553 = vld [vmem:[%s319 + $0x4f8] sm:$0xff]
        %v554 = vld [vmem:[%s319 + $0x500] sm:$0xff]
        %v555 = vld [vmem:[%s319 + $0x508] sm:$0xff]
        %v556 = vld [vmem:[%s319 + $0x510] sm:$0xff]
        %v557 = vld [vmem:[%s319 + $0x518] sm:$0xff]
        %v558 = vld [vmem:[%s319 + $0x520] sm:$0xff]
        %v559 = vld [vmem:[%s319 + $0x528] sm:$0xff]
        %v560 = vld [vmem:[%s319 + $0x530] sm:$0xff]
        %v561 = vld [vmem:[%s319 + $0x538] sm:$0xff]
        %v562 = vld [vmem:[%s319 + $0x540] sm:$0xff]
        %v563 = vld [vmem:[%s319 + $0x548] sm:$0xff]
        %v564 = vld [vmem:[%s319 + $0x550] sm:$0xff]
        %v565 = vld [vmem:[%s319 + $0x558] sm:$0xff]
        %v566 = vld [vmem:[%s319 + $0x560] sm:$0xff]
        %v567 = vld [vmem:[%s319 + $0x568] sm:$0xff]
        %v568 = vld [vmem:[%s319 + $0x570] sm:$0xff]
        %v569 = vld [vmem:[%s319 + $0x578] sm:$0xff]
        %v570 = vld [vmem:[%s319 + $0x580] sm:$0xff]
        %v571 = vld [vmem:[%s319 + $0x588] sm:$0xff]
        %v572 = vld [vmem:[%s319 + $0x590] sm:$0xff]
        %v573 = vld [vmem:[%s319 + $0x598] sm:$0xff]
        %v574 = vld [vmem:[%s319 + $0x5a0] sm:$0xff]
        %v575 = vld [vmem:[%s319 + $0x5a8] sm:$0xff]
        %v576 = vld [vmem:[%s319 + $0x5b0] sm:$0xff]
        %v577 = vld [vmem:[%s319 + $0x5b8] sm:$0xff]
        %v578 = vld [vmem:[%s319 + $0x5c0] sm:$0xff]
        %v579 = vld [vmem:[%s319 + $0x5c8] sm:$0xff]
        %v580 = vld [vmem:[%s319 + $0x5d0] sm:$0xff]
        %v581 = vld [vmem:[%s319 + $0x5d8] sm:$0xff]
        %v582 = vld [vmem:[%s319 + $0x5e0] sm:$0xff]
        %v583 = vld [vmem:[%s319 + $0x5e8] sm:$0xff]
        %v584 = vld [vmem:[%s319 + $0x5f0] sm:$0xff]
        %v585 = vld [vmem:[%s319 + $0x5f8] sm:$0xff]
        %v586 = vld [vmem:[%s319 + $0x600] sm:$0xff]
        %v587 = vld [vmem:[%s319 + $0x608] sm:$0xff]
        %v588 = vld [vmem:[%s319 + $0x610] sm:$0xff]
        %v589 = vld [vmem:[%s319 + $0x618] sm:$0xff]
        %v590 = vld [vmem:[%s319 + $0x620] sm:$0xff]
        %v591 = vld [vmem:[%s319 + $0x628] sm:$0xff]
        %v592 = vld [vmem:[%s319 + $0x630] sm:$0xff]
        %v593 = vld [vmem:[%s319 + $0x638] sm:$0xff]
        %v594 = vld [vmem:[%s319 + $0x640] sm:$0xff]
        %v595 = vld [vmem:[%s319 + $0x648] sm:$0xff]
        %v596 = vld [vmem:[%s319 + $0x650] sm:$0xff]
        %v597 = vld [vmem:[%s319 + $0x658] sm:$0xff]
        %v598 = vld [vmem:[%s319 + $0x660] sm:$0xff]
        %v599 = vld [vmem:[%s319 + $0x668] sm:$0xff]
        %v600 = vld [vmem:[%s319 + $0x670] sm:$0xff]
        %v601 = vld [vmem:[%s319 + $0x678] sm:$0xff]
        %v602 = vld [vmem:[%s319 + $0x680] sm:$0xff]
        %v603 = vld [vmem:[%s319 + $0x688] sm:$0xff]
        %v604 = vld [vmem:[%s319 + $0x690] sm:$0xff]
        %v605 = vld [vmem:[%s319 + $0x698] sm:$0xff]
        %v606 = vld [vmem:[%s319 + $0x6a0] sm:$0xff]
        %v607 = vld [vmem:[%s319 + $0x6a8] sm:$0xff]
        %v608 = vld [vmem:[%s319 + $0x6b0] sm:$0xff]
        %v609 = vld [vmem:[%s319 + $0x6b8] sm:$0xff]
        %v610 = vld [vmem:[%s319 + $0x6c0] sm:$0xff]
        %v611 = vld [vmem:[%s319 + $0x6c8] sm:$0xff]
        %v612 = vld [vmem:[%s319 + $0x6d0] sm:$0xff]
        %v613 = vld [vmem:[%s319 + $0x6d8] sm:$0xff]
        %v614 = vld [vmem:[%s319 + $0x6e0] sm:$0xff]
        %v615 = vld [vmem:[%s319 + $0x6e8] sm:$0xff]
        %v616 = vld [vmem:[%s319 + $0x6f0] sm:$0xff]
        %v617 = vld [vmem:[%s319 + $0x6f8] sm:$0xff]
        %v618 = vld [vmem:[%s319 + $0x700] sm:$0xff]
        %v619 = vld [vmem:[%s319 + $0x708] sm:$0xff]
        %v620 = vld [vmem:[%s319 + $0x710] sm:$0xff]
        %v621 = vld [vmem:[%s319 + $0x718] sm:$0xff]
        %v622 = vld [vmem:[%s319 + $0x720] sm:$0xff]
        %v623 = vld [vmem:[%s319 + $0x728] sm:$0xff]
        %v624 = vld [vmem:[%s319 + $0x730] sm:$0xff]
        %v625 = vld [vmem:[%s319 + $0x738] sm:$0xff]
        %v626 = vld [vmem:[%s319 + $0x740] sm:$0xff]
        %v627 = vld [vmem:[%s319 + $0x748] sm:$0xff]
        %v628 = vld [vmem:[%s319 + $0x750] sm:$0xff]
        %v629 = vld [vmem:[%s319 + $0x758] sm:$0xff]
        %v630 = vld [vmem:[%s319 + $0x760] sm:$0xff]
        %v631 = vld [vmem:[%s319 + $0x768] sm:$0xff]
        %v632 = vld [vmem:[%s319 + $0x770] sm:$0xff]
        %v633 = vld [vmem:[%s319 + $0x778] sm:$0xff]
        %v634 = vld [vmem:[%s319 + $0x780] sm:$0xff]
        %v635 = vld [vmem:[%s319 + $0x788] sm:$0xff]
        %v636 = vld [vmem:[%s319 + $0x790] sm:$0xff]
        %v637 = vld [vmem:[%s319 + $0x798] sm:$0xff]
        %v638 = vld [vmem:[%s319 + $0x7a0] sm:$0xff]
        %v639 = vld [vmem:[%s319 + $0x7a8] sm:$0xff]
        %v640 = vld [vmem:[%s319 + $0x7b0] sm:$0xff]
        %v641 = vld [vmem:[%s319 + $0x7b8] sm:$0xff]
        %v642 = vld [vmem:[%s319 + $0x7c0] sm:$0xff]
        %v643 = vld [vmem:[%s319 + $0x7c8] sm:$0xff]
        %v644 = vld [vmem:[%s319 + $0x7d0] sm:$0xff]
        %v645 = vld [vmem:[%s319 + $0x7d8] sm:$0xff]
        %v646 = vld [vmem:[%s319 + $0x7e0] sm:$0xff]
        %v647 = vld [vmem:[%s319 + $0x7e8] sm:$0xff]
        %v648 = vld [vmem:[%s319 + $0x7f0] sm:$0xff]
        %v649 = vld [vmem:[%s319 + $0x7f8] sm:$0xff]
        %v650 = vld [vmem:[#allocation7] sm:$0xf]
        %v651 = vld [vmem:[#allocation7 + $0x4] sm:$0xf]
        %v652 = vld [vmem:[%s332] sm:$0xff]
        %v653 = vld [vmem:[%s332 + $0x8] sm:$0xff]
        %v654 = vld [vmem:[%s332 + $0x10] sm:$0xff]
        %v655 = vld [vmem:[%s332 + $0x18] sm:$0xff]
        %v656 = vld [vmem:[%s332 + $0x20] sm:$0xff]
        %v657 = vld [vmem:[%s332 + $0x28] sm:$0xff]
        %v658 = vld [vmem:[%s332 + $0x30] sm:$0xff]
        %v659 = vld [vmem:[%s332 + $0x38] sm:$0xff]
        %v660 = vld [vmem:[%s332 + $0x40] sm:$0xff]
        %v661 = vld [vmem:[%s332 + $0x48] sm:$0xff]
        %v662 = vld [vmem:[%s332 + $0x50] sm:$0xff]
        %v663 = vld [vmem:[%s332 + $0x58] sm:$0xff]
        %v664 = vld [vmem:[%s332 + $0x60] sm:$0xff]
        %v665 = vld [vmem:[%s332 + $0x68] sm:$0xff]
        %v666 = vld [vmem:[%s332 + $0x70] sm:$0xff]
        %v667 = vld [vmem:[%s332 + $0x78] sm:$0xff]
        %v668 = vld [vmem:[%s332 + $0x80] sm:$0xff]
        %v669 = vld [vmem:[%s332 + $0x88] sm:$0xff]
        %v670 = vld [vmem:[%s332 + $0x90] sm:$0xff]
        %v671 = vld [vmem:[%s332 + $0x98] sm:$0xff]
        %v672 = vld [vmem:[%s332 + $0xa0] sm:$0xff]
        %v673 = vld [vmem:[%s332 + $0xa8] sm:$0xff]
        %v674 = vld [vmem:[%s332 + $0xb0] sm:$0xff]
        %v675 = vld [vmem:[%s332 + $0xb8] sm:$0xff]
        %v676 = vld [vmem:[%s332 + $0xc0] sm:$0xff]
        %v677 = vld [vmem:[%s332 + $0xc8] sm:$0xff]
        %v678 = vld [vmem:[%s332 + $0xd0] sm:$0xff]
        %v679 = vld [vmem:[%s332 + $0xd8] sm:$0xff]
        %v680 = vld [vmem:[%s332 + $0xe0] sm:$0xff]
        %v681 = vld [vmem:[%s332 + $0xe8] sm:$0xff]
        %v682 = vld [vmem:[%s332 + $0xf0] sm:$0xff]
        %v683 = vld [vmem:[%s332 + $0xf8] sm:$0xff]
        %v686 = vunpack.c.l.b16 %v650
        %v687 = vunpack.c.l.b16 %v651
        %v688 = vpack.c.b16 %v687, %v686
        %v722 = vunpack.c.l.b16 %v652
        %v723 = vunpack.c.h.b16 %v652
        %v724 = vunpack.c.l.b16 %v653
        %v725 = vunpack.c.h.b16 %v653
        %v726 = vunpack.c.l.b16 %v654
        %v727 = vunpack.c.h.b16 %v654
        %v728 = vunpack.c.l.b16 %v655
        %v729 = vunpack.c.h.b16 %v655
        %v730 = vunpack.c.l.b16 %v656
        %v731 = vunpack.c.h.b16 %v656
        %v732 = vunpack.c.l.b16 %v657
        %v733 = vunpack.c.h.b16 %v657
        %v734 = vunpack.c.l.b16 %v658
        %v735 = vunpack.c.h.b16 %v658
        %v736 = vunpack.c.l.b16 %v659
        %v737 = vunpack.c.h.b16 %v659
        %v738 = vunpack.c.l.b16 %v660
        %v739 = vunpack.c.h.b16 %v660
        %v740 = vunpack.c.l.b16 %v661
        %v741 = vunpack.c.h.b16 %v661
        %v742 = vunpack.c.l.b16 %v662
        %v743 = vunpack.c.h.b16 %v662
        %v744 = vunpack.c.l.b16 %v663
        %v745 = vunpack.c.h.b16 %v663
        %v746 = vunpack.c.l.b16 %v664
        %v747 = vunpack.c.h.b16 %v664
        %v748 = vunpack.c.l.b16 %v665
        %v749 = vunpack.c.h.b16 %v665
        %v750 = vunpack.c.l.b16 %v666
        %v751 = vunpack.c.h.b16 %v666
        %v752 = vunpack.c.l.b16 %v667
        %v753 = vunpack.c.h.b16 %v667
        %v754 = vunpack.c.l.b16 %v668
        %v755 = vunpack.c.h.b16 %v668
        %v756 = vunpack.c.l.b16 %v669
        %v757 = vunpack.c.h.b16 %v669
        %v758 = vunpack.c.l.b16 %v670
        %v759 = vunpack.c.h.b16 %v670
        %v760 = vunpack.c.l.b16 %v671
        %v761 = vunpack.c.h.b16 %v671
        %v762 = vunpack.c.l.b16 %v672
        %v763 = vunpack.c.h.b16 %v672
        %v764 = vunpack.c.l.b16 %v673
        %v765 = vunpack.c.h.b16 %v673
        %v766 = vunpack.c.l.b16 %v674
        %v767 = vunpack.c.h.b16 %v674
        %v768 = vunpack.c.l.b16 %v675
        %v769 = vunpack.c.h.b16 %v675
        %v770 = vunpack.c.l.b16 %v676
        %v771 = vunpack.c.h.b16 %v676
        %v772 = vunpack.c.l.b16 %v677
        %v773 = vunpack.c.h.b16 %v677
        %v774 = vunpack.c.l.b16 %v678
        %v775 = vunpack.c.h.b16 %v678
        %v776 = vunpack.c.l.b16 %v679
        %v777 = vunpack.c.h.b16 %v679
        %v778 = vunpack.c.l.b16 %v680
        %v779 = vunpack.c.h.b16 %v680
        %v780 = vunpack.c.l.b16 %v681
        %v781 = vunpack.c.h.b16 %v681
        %v782 = vunpack.c.l.b16 %v682
        %v783 = vunpack.c.h.b16 %v682
        %v784 = vunpack.c.l.b16 %v683
        %v785 = vunpack.c.h.b16 %v683
        %v786 = vpack.c.b16 %v726, %v722
        %v787 = vpack.c.b16 %v727, %v723
        %v788 = vpack.c.b16 %v728, %v724
        %v789 = vpack.c.b16 %v729, %v725
        %v790 = vpack.c.b16 %v734, %v730
        %v791 = vpack.c.b16 %v735, %v731
        %v792 = vpack.c.b16 %v736, %v732
        %v793 = vpack.c.b16 %v737, %v733
        %v794 = vpack.c.b16 %v742, %v738
        %v795 = vpack.c.b16 %v743, %v739
        %v796 = vpack.c.b16 %v744, %v740
        %v797 = vpack.c.b16 %v745, %v741
        %v798 = vpack.c.b16 %v750, %v746
        %v799 = vpack.c.b16 %v751, %v747
        %v800 = vpack.c.b16 %v752, %v748
        %v801 = vpack.c.b16 %v753, %v749
        %v802 = vpack.c.b16 %v758, %v754
        %v803 = vpack.c.b16 %v759, %v755
        %v804 = vpack.c.b16 %v760, %v756
        %v805 = vpack.c.b16 %v761, %v757
        %v806 = vpack.c.b16 %v766, %v762
        %v807 = vpack.c.b16 %v767, %v763
        %v808 = vpack.c.b16 %v768, %v764
        %v809 = vpack.c.b16 %v769, %v765
        %v810 = vpack.c.b16 %v774, %v770
        %v811 = vpack.c.b16 %v775, %v771
        %v812 = vpack.c.b16 %v776, %v772
        %v813 = vpack.c.b16 %v777, %v773
        %v814 = vpack.c.b16 %v782, %v778
        %v815 = vpack.c.b16 %v783, %v779
        %v816 = vpack.c.b16 %v784, %v780
        %v817 = vpack.c.b16 %v785, %v781
        %850 = vmatprep.subr.bf16.mxu0 %v787
        %851 = vmatpush1.bf16.msra.mxu0 %v786
        %852 = vmatprep.subr.bf16.mxu0 %v791
        %853 = vmatpush1.bf16.msra.mxu0 %v790
        %854 = vmatprep.subr.bf16.mxu0 %v795
        %855 = vmatpush1.bf16.msra.mxu0 %v794
        %856 = vmatprep.subr.bf16.mxu0 %v799
        %857 = vmatpush1.bf16.msra.mxu0 %v798
        %858 = vmatprep.subr.bf16.mxu0 %v803
        %859 = vmatpush1.bf16.msra.mxu0 %v802
        %860 = vmatprep.subr.bf16.mxu0 %v807
        %861 = vmatpush1.bf16.msra.mxu0 %v806
        %862 = vmatprep.subr.bf16.mxu0 %v811
        %863 = vmatpush1.bf16.msra.mxu0 %v810
        %864 = vmatprep.subr.bf16.mxu0 %v815
        %865 = vmatpush1.bf16.msra.mxu0 %v814
        %866 = vmatprep.subr.bf16.mxu0 0
        %867 = vmatpush1.bf16.msra.mxu0 0
        %868 = vmatprep.subr.bf16.mxu0 0
        %869 = vmatpush1.bf16.msra.mxu0 0
        %870 = vmatprep.subr.bf16.mxu0 0
        %871 = vmatpush1.bf16.msra.mxu0 0
        %872 = vmatprep.subr.bf16.mxu0 0
        %873 = vmatpush1.bf16.msra.mxu0 0
        %874 = vmatprep.subr.bf16.mxu0 0
        %875 = vmatpush1.bf16.msra.mxu0 0
        %876 = vmatprep.subr.bf16.mxu0 0
        %877 = vmatpush1.bf16.msra.mxu0 0
        %878 = vmatprep.subr.bf16.mxu0 0
        %879 = vmatpush1.bf16.msra.mxu0 0
        %880 = vmatprep.subr.bf16.mxu0 0
        %881 = vmatpush1.bf16.msra.mxu0 0
        %882 = vmatprep.mubr.bf16.mxu0 0
        %883 = vmatmul.mubr.bf16.gmra.mrb[0].mxu0 %v688
        %v884 = vpop.f32.mrb[0].mxu0
        %v885 = vadd.f32 0.0, %v884
        %v886 = vpop.f32.mrb[0].mxu0
        %v887 = vadd.f32 0.0, %v886
        %v888 = vpop.f32.mrb[0].mxu0
        %v889 = vadd.f32 0.0, %v888
        %v890 = vpop.f32.mrb[0].mxu0
        %v891 = vadd.f32 0.0, %v890
        %892 = vdwg.mxu0
        %893 = vmatprep.subr.bf16.mxu0 %v789
        %894 = vmatpush1.bf16.msra.mxu0 %v788
        %895 = vmatprep.subr.bf16.mxu0 %v793
        %896 = vmatpush1.bf16.msra.mxu0 %v792
        %897 = vmatprep.subr.bf16.mxu0 %v797
        %898 = vmatpush1.bf16.msra.mxu0 %v796
        %899 = vmatprep.subr.bf16.mxu0 %v801
        %900 = vmatpush1.bf16.msra.mxu0 %v800
        %901 = vmatprep.subr.bf16.mxu0 %v805
        %902 = vmatpush1.bf16.msra.mxu0 %v804
        %903 = vmatprep.subr.bf16.mxu0 %v809
        %904 = vmatpush1.bf16.msra.mxu0 %v808
        %905 = vmatprep.subr.bf16.mxu0 %v813
        %906 = vmatpush1.bf16.msra.mxu0 %v812
        %907 = vmatprep.subr.bf16.mxu0 %v817
        %908 = vmatpush1.bf16.msra.mxu0 %v816
        %909 = vmatprep.subr.bf16.mxu0 0
        %910 = vmatpush1.bf16.msra.mxu0 0
        %911 = vmatprep.subr.bf16.mxu0 0
        %912 = vmatpush1.bf16.msra.mxu0 0
        %913 = vmatprep.subr.bf16.mxu0 0
        %914 = vmatpush1.bf16.msra.mxu0 0
        %915 = vmatprep.subr.bf16.mxu0 0
        %916 = vmatpush1.bf16.msra.mxu0 0
        %917 = vmatprep.subr.bf16.mxu0 0
        %918 = vmatpush1.bf16.msra.mxu0 0
        %919 = vmatprep.subr.bf16.mxu0 0
        %920 = vmatpush1.bf16.msra.mxu0 0
        %921 = vmatprep.subr.bf16.mxu0 0
        %922 = vmatpush1.bf16.msra.mxu0 0
        %923 = vmatprep.subr.bf16.mxu0 0
        %924 = vmatpush1.bf16.msra.mxu0 0
        %925 = vmatprep.mubr.bf16.mxu0 0
        %926 = vmatmul.mubr.bf16.gmra.mrb[0].mxu0 %v688
        %v927 = vpop.f32.mrb[0].mxu0
        %v928 = vadd.f32 0.0, %v927
        %v929 = vpop.f32.mrb[0].mxu0
        %v930 = vadd.f32 0.0, %v929
        %v931 = vpop.f32.mrb[0].mxu0
        %v932 = vadd.f32 0.0, %v931
        %v933 = vpop.f32.mrb[0].mxu0
        %v934 = vadd.f32 0.0, %v933
        %935 = vdwg.mxu0
        %v944 = vunpack.c.l.b16 %v386
        %v945 = vunpack.c.h.b16 %v386
        %v946 = vunpack.c.l.b16 %v387
        %v947 = vunpack.c.h.b16 %v387
        %v948 = vunpack.c.l.b16 %v388
        %v949 = vunpack.c.h.b16 %v388
        %v950 = vunpack.c.l.b16 %v389
        %v951 = vunpack.c.h.b16 %v389
        %v952 = vunpack.c.l.b16 %v390
        %v953 = vunpack.c.h.b16 %v390
        %v954 = vunpack.c.l.b16 %v391
        %v955 = vunpack.c.h.b16 %v391
        %v956 = vunpack.c.l.b16 %v392
        %v957 = vunpack.c.h.b16 %v392
        %v958 = vunpack.c.l.b16 %v393
        %v959 = vunpack.c.h.b16 %v393
        %v960 = vpack.c.b16 %v952, %v944
        %v961 = vpack.c.b16 %v953, %v945
        %v962 = vpack.c.b16 %v954, %v946
        %v963 = vpack.c.b16 %v955, %v947
        %v964 = vpack.c.b16 %v956, %v948
        %v965 = vpack.c.b16 %v957, %v949
        %v966 = vpack.c.b16 %v958, %v950
        %v967 = vpack.c.b16 %v959, %v951
        %v1232 = vunpack.c.l.b16 %v394
        %v1233 = vunpack.c.h.b16 %v394
        %v1234 = vunpack.c.l.b16 %v395
        %v1235 = vunpack.c.h.b16 %v395
        %v1236 = vunpack.c.l.b16 %v396
        %v1237 = vunpack.c.h.b16 %v396
        %v1238 = vunpack.c.l.b16 %v397
        %v1239 = vunpack.c.h.b16 %v397
        %v1240 = vunpack.c.l.b16 %v398
        %v1241 = vunpack.c.h.b16 %v398
        %v1242 = vunpack.c.l.b16 %v399
        %v1243 = vunpack.c.h.b16 %v399
        %v1244 = vunpack.c.l.b16 %v400
        %v1245 = vunpack.c.h.b16 %v400
        %v1246 = vunpack.c.l.b16 %v401
        %v1247 = vunpack.c.h.b16 %v401
        %v1248 = vunpack.c.l.b16 %v402
        %v1249 = vunpack.c.h.b16 %v402
        %v1250 = vunpack.c.l.b16 %v403
        %v1251 = vunpack.c.h.b16 %v403
        %v1252 = vunpack.c.l.b16 %v404
        %v1253 = vunpack.c.h.b16 %v404
        %v1254 = vunpack.c.l.b16 %v405
        %v1255 = vunpack.c.h.b16 %v405
        %v1256 = vunpack.c.l.b16 %v406
        %v1257 = vunpack.c.h.b16 %v406
        %v1258 = vunpack.c.l.b16 %v407
        %v1259 = vunpack.c.h.b16 %v407
        %v1260 = vunpack.c.l.b16 %v408
        %v1261 = vunpack.c.h.b16 %v408
        %v1262 = vunpack.c.l.b16 %v409
        %v1263 = vunpack.c.h.b16 %v409
        %v1264 = vunpack.c.l.b16 %v410
        %v1265 = vunpack.c.h.b16 %v410
        %v1266 = vunpack.c.l.b16 %v411
        %v1267 = vunpack.c.h.b16 %v411
        %v1268 = vunpack.c.l.b16 %v412
        %v1269 = vunpack.c.h.b16 %v412
        %v1270 = vunpack.c.l.b16 %v413
        %v1271 = vunpack.c.h.b16 %v413
        %v1272 = vunpack.c.l.b16 %v414
        %v1273 = vunpack.c.h.b16 %v414
        %v1274 = vunpack.c.l.b16 %v415
        %v1275 = vunpack.c.h.b16 %v415
        %v1276 = vunpack.c.l.b16 %v416
        %v1277 = vunpack.c.h.b16 %v416
        %v1278 = vunpack.c.l.b16 %v417
        %v1279 = vunpack.c.h.b16 %v417
        %v1280 = vunpack.c.l.b16 %v418
        %v1281 = vunpack.c.h.b16 %v418
        %v1282 = vunpack.c.l.b16 %v419
        %v1283 = vunpack.c.h.b16 %v419
        %v1284 = vunpack.c.l.b16 %v420
        %v1285 = vunpack.c.h.b16 %v420
        %v1286 = vunpack.c.l.b16 %v421
        %v1287 = vunpack.c.h.b16 %v421
        %v1288 = vunpack.c.l.b16 %v422
        %v1289 = vunpack.c.h.b16 %v422
        %v1290 = vunpack.c.l.b16 %v423
        %v1291 = vunpack.c.h.b16 %v423
        %v1292 = vunpack.c.l.b16 %v424
        %v1293 = vunpack.c.h.b16 %v424
        %v1294 = vunpack.c.l.b16 %v425
        %v1295 = vunpack.c.h.b16 %v425
        %v1296 = vunpack.c.l.b16 %v426
        %v1297 = vunpack.c.h.b16 %v426
        %v1298 = vunpack.c.l.b16 %v427
        %v1299 = vunpack.c.h.b16 %v427
        %v1300 = vunpack.c.l.b16 %v428
        %v1301 = vunpack.c.h.b16 %v428
        %v1302 = vunpack.c.l.b16 %v429
        %v1303 = vunpack.c.h.b16 %v429
        %v1304 = vunpack.c.l.b16 %v430
        %v1305 = vunpack.c.h.b16 %v430
        %v1306 = vunpack.c.l.b16 %v431
        %v1307 = vunpack.c.h.b16 %v431
        %v1308 = vunpack.c.l.b16 %v432
        %v1309 = vunpack.c.h.b16 %v432
        %v1310 = vunpack.c.l.b16 %v433
        %v1311 = vunpack.c.h.b16 %v433
        %v1312 = vunpack.c.l.b16 %v434
        %v1313 = vunpack.c.h.b16 %v434
        %v1314 = vunpack.c.l.b16 %v435
        %v1315 = vunpack.c.h.b16 %v435
        %v1316 = vunpack.c.l.b16 %v436
        %v1317 = vunpack.c.h.b16 %v436
        %v1318 = vunpack.c.l.b16 %v437
        %v1319 = vunpack.c.h.b16 %v437
        %v1320 = vunpack.c.l.b16 %v438
        %v1321 = vunpack.c.h.b16 %v438
        %v1322 = vunpack.c.l.b16 %v439
        %v1323 = vunpack.c.h.b16 %v439
        %v1324 = vunpack.c.l.b16 %v440
        %v1325 = vunpack.c.h.b16 %v440
        %v1326 = vunpack.c.l.b16 %v441
        %v1327 = vunpack.c.h.b16 %v441
        %v1328 = vunpack.c.l.b16 %v442
        %v1329 = vunpack.c.h.b16 %v442
        %v1330 = vunpack.c.l.b16 %v443
        %v1331 = vunpack.c.h.b16 %v443
        %v1332 = vunpack.c.l.b16 %v444
        %v1333 = vunpack.c.h.b16 %v444
        %v1334 = vunpack.c.l.b16 %v445
        %v1335 = vunpack.c.h.b16 %v445
        %v1336 = vunpack.c.l.b16 %v446
        %v1337 = vunpack.c.h.b16 %v446
        %v1338 = vunpack.c.l.b16 %v447
        %v1339 = vunpack.c.h.b16 %v447
        %v1340 = vunpack.c.l.b16 %v448
        %v1341 = vunpack.c.h.b16 %v448
        %v1342 = vunpack.c.l.b16 %v449
        %v1343 = vunpack.c.h.b16 %v449
        %v1344 = vunpack.c.l.b16 %v450
        %v1345 = vunpack.c.h.b16 %v450
        %v1346 = vunpack.c.l.b16 %v451
        %v1347 = vunpack.c.h.b16 %v451
        %v1348 = vunpack.c.l.b16 %v452
        %v1349 = vunpack.c.h.b16 %v452
        %v1350 = vunpack.c.l.b16 %v453
        %v1351 = vunpack.c.h.b16 %v453
        %v1352 = vunpack.c.l.b16 %v454
        %v1353 = vunpack.c.h.b16 %v454
        %v1354 = vunpack.c.l.b16 %v455
        %v1355 = vunpack.c.h.b16 %v455
        %v1356 = vunpack.c.l.b16 %v456
        %v1357 = vunpack.c.h.b16 %v456
        %v1358 = vunpack.c.l.b16 %v457
        %v1359 = vunpack.c.h.b16 %v457
        %v1360 = vunpack.c.l.b16 %v458
        %v1361 = vunpack.c.h.b16 %v458
        %v1362 = vunpack.c.l.b16 %v459
        %v1363 = vunpack.c.h.b16 %v459
        %v1364 = vunpack.c.l.b16 %v460
        %v1365 = vunpack.c.h.b16 %v460
        %v1366 = vunpack.c.l.b16 %v461
        %v1367 = vunpack.c.h.b16 %v461
        %v1368 = vunpack.c.l.b16 %v462
        %v1369 = vunpack.c.h.b16 %v462
        %v1370 = vunpack.c.l.b16 %v463
        %v1371 = vunpack.c.h.b16 %v463
        %v1372 = vunpack.c.l.b16 %v464
        %v1373 = vunpack.c.h.b16 %v464
        %v1374 = vunpack.c.l.b16 %v465
        %v1375 = vunpack.c.h.b16 %v465
        %v1376 = vunpack.c.l.b16 %v466
        %v1377 = vunpack.c.h.b16 %v466
        %v1378 = vunpack.c.l.b16 %v467
        %v1379 = vunpack.c.h.b16 %v467
        %v1380 = vunpack.c.l.b16 %v468
        %v1381 = vunpack.c.h.b16 %v468
        %v1382 = vunpack.c.l.b16 %v469
        %v1383 = vunpack.c.h.b16 %v469
        %v1384 = vunpack.c.l.b16 %v470
        %v1385 = vunpack.c.h.b16 %v470
        %v1386 = vunpack.c.l.b16 %v471
        %v1387 = vunpack.c.h.b16 %v471
        %v1388 = vunpack.c.l.b16 %v472
        %v1389 = vunpack.c.h.b16 %v472
        %v1390 = vunpack.c.l.b16 %v473
        %v1391 = vunpack.c.h.b16 %v473
        %v1392 = vunpack.c.l.b16 %v474
        %v1393 = vunpack.c.h.b16 %v474
        %v1394 = vunpack.c.l.b16 %v475
        %v1395 = vunpack.c.h.b16 %v475
        %v1396 = vunpack.c.l.b16 %v476
        %v1397 = vunpack.c.h.b16 %v476
        %v1398 = vunpack.c.l.b16 %v477
        %v1399 = vunpack.c.h.b16 %v477
        %v1400 = vunpack.c.l.b16 %v478
        %v1401 = vunpack.c.h.b16 %v478
        %v1402 = vunpack.c.l.b16 %v479
        %v1403 = vunpack.c.h.b16 %v479
        %v1404 = vunpack.c.l.b16 %v480
        %v1405 = vunpack.c.h.b16 %v480
        %v1406 = vunpack.c.l.b16 %v481
        %v1407 = vunpack.c.h.b16 %v481
        %v1408 = vunpack.c.l.b16 %v482
        %v1409 = vunpack.c.h.b16 %v482
        %v1410 = vunpack.c.l.b16 %v483
        %v1411 = vunpack.c.h.b16 %v483
        %v1412 = vunpack.c.l.b16 %v484
        %v1413 = vunpack.c.h.b16 %v484
        %v1414 = vunpack.c.l.b16 %v485
        %v1415 = vunpack.c.h.b16 %v485
        %v1416 = vunpack.c.l.b16 %v486
        %v1417 = vunpack.c.h.b16 %v486
        %v1418 = vunpack.c.l.b16 %v487
        %v1419 = vunpack.c.h.b16 %v487
        %v1420 = vunpack.c.l.b16 %v488
        %v1421 = vunpack.c.h.b16 %v488
        %v1422 = vunpack.c.l.b16 %v489
        %v1423 = vunpack.c.h.b16 %v489
        %v1424 = vunpack.c.l.b16 %v490
        %v1425 = vunpack.c.h.b16 %v490
        %v1426 = vunpack.c.l.b16 %v491
        %v1427 = vunpack.c.h.b16 %v491
        %v1428 = vunpack.c.l.b16 %v492
        %v1429 = vunpack.c.h.b16 %v492
        %v1430 = vunpack.c.l.b16 %v493
        %v1431 = vunpack.c.h.b16 %v493
        %v1432 = vunpack.c.l.b16 %v494
        %v1433 = vunpack.c.h.b16 %v494
        %v1434 = vunpack.c.l.b16 %v495
        %v1435 = vunpack.c.h.b16 %v495
        %v1436 = vunpack.c.l.b16 %v496
        %v1437 = vunpack.c.h.b16 %v496
        %v1438 = vunpack.c.l.b16 %v497
        %v1439 = vunpack.c.h.b16 %v497
        %v1440 = vunpack.c.l.b16 %v498
        %v1441 = vunpack.c.h.b16 %v498
        %v1442 = vunpack.c.l.b16 %v499
        %v1443 = vunpack.c.h.b16 %v499
        %v1444 = vunpack.c.l.b16 %v500
        %v1445 = vunpack.c.h.b16 %v500
        %v1446 = vunpack.c.l.b16 %v501
        %v1447 = vunpack.c.h.b16 %v501
        %v1448 = vunpack.c.l.b16 %v502
        %v1449 = vunpack.c.h.b16 %v502
        %v1450 = vunpack.c.l.b16 %v503
        %v1451 = vunpack.c.h.b16 %v503
        %v1452 = vunpack.c.l.b16 %v504
        %v1453 = vunpack.c.h.b16 %v504
        %v1454 = vunpack.c.l.b16 %v505
        %v1455 = vunpack.c.h.b16 %v505
        %v1456 = vunpack.c.l.b16 %v506
        %v1457 = vunpack.c.h.b16 %v506
        %v1458 = vunpack.c.l.b16 %v507
        %v1459 = vunpack.c.h.b16 %v507
        %v1460 = vunpack.c.l.b16 %v508
        %v1461 = vunpack.c.h.b16 %v508
        %v1462 = vunpack.c.l.b16 %v509
        %v1463 = vunpack.c.h.b16 %v509
        %v1464 = vunpack.c.l.b16 %v510
        %v1465 = vunpack.c.h.b16 %v510
        %v1466 = vunpack.c.l.b16 %v511
        %v1467 = vunpack.c.h.b16 %v511
        %v1468 = vunpack.c.l.b16 %v512
        %v1469 = vunpack.c.h.b16 %v512
        %v1470 = vunpack.c.l.b16 %v513
        %v1471 = vunpack.c.h.b16 %v513
        %v1472 = vunpack.c.l.b16 %v514
        %v1473 = vunpack.c.h.b16 %v514
        %v1474 = vunpack.c.l.b16 %v515
        %v1475 = vunpack.c.h.b16 %v515
        %v1476 = vunpack.c.l.b16 %v516
        %v1477 = vunpack.c.h.b16 %v516
        %v1478 = vunpack.c.l.b16 %v517
        %v1479 = vunpack.c.h.b16 %v517
        %v1480 = vunpack.c.l.b16 %v518
        %v1481 = vunpack.c.h.b16 %v518
        %v1482 = vunpack.c.l.b16 %v519
        %v1483 = vunpack.c.h.b16 %v519
        %v1484 = vunpack.c.l.b16 %v520
        %v1485 = vunpack.c.h.b16 %v520
        %v1486 = vunpack.c.l.b16 %v521
        %v1487 = vunpack.c.h.b16 %v521
        %v1488 = vunpack.c.l.b16 %v522
        %v1489 = vunpack.c.h.b16 %v522
        %v1490 = vunpack.c.l.b16 %v523
        %v1491 = vunpack.c.h.b16 %v523
        %v1492 = vunpack.c.l.b16 %v524
        %v1493 = vunpack.c.h.b16 %v524
        %v1494 = vunpack.c.l.b16 %v525
        %v1495 = vunpack.c.h.b16 %v525
        %v1496 = vunpack.c.l.b16 %v526
        %v1497 = vunpack.c.h.b16 %v526
        %v1498 = vunpack.c.l.b16 %v527
        %v1499 = vunpack.c.h.b16 %v527
        %v1500 = vunpack.c.l.b16 %v528
        %v1501 = vunpack.c.h.b16 %v528
        %v1502 = vunpack.c.l.b16 %v529
        %v1503 = vunpack.c.h.b16 %v529
        %v1504 = vunpack.c.l.b16 %v530
        %v1505 = vunpack.c.h.b16 %v530
        %v1506 = vunpack.c.l.b16 %v531
        %v1507 = vunpack.c.h.b16 %v531
        %v1508 = vunpack.c.l.b16 %v532
        %v1509 = vunpack.c.h.b16 %v532
        %v1510 = vunpack.c.l.b16 %v533
        %v1511 = vunpack.c.h.b16 %v533
        %v1512 = vunpack.c.l.b16 %v534
        %v1513 = vunpack.c.h.b16 %v534
        %v1514 = vunpack.c.l.b16 %v535
        %v1515 = vunpack.c.h.b16 %v535
        %v1516 = vunpack.c.l.b16 %v536
        %v1517 = vunpack.c.h.b16 %v536
        %v1518 = vunpack.c.l.b16 %v537
        %v1519 = vunpack.c.h.b16 %v537
        %v1520 = vunpack.c.l.b16 %v538
        %v1521 = vunpack.c.h.b16 %v538
        %v1522 = vunpack.c.l.b16 %v539
        %v1523 = vunpack.c.h.b16 %v539
        %v1524 = vunpack.c.l.b16 %v540
        %v1525 = vunpack.c.h.b16 %v540
        %v1526 = vunpack.c.l.b16 %v541
        %v1527 = vunpack.c.h.b16 %v541
        %v1528 = vunpack.c.l.b16 %v542
        %v1529 = vunpack.c.h.b16 %v542
        %v1530 = vunpack.c.l.b16 %v543
        %v1531 = vunpack.c.h.b16 %v543
        %v1532 = vunpack.c.l.b16 %v544
        %v1533 = vunpack.c.h.b16 %v544
        %v1534 = vunpack.c.l.b16 %v545
        %v1535 = vunpack.c.h.b16 %v545
        %v1536 = vunpack.c.l.b16 %v546
        %v1537 = vunpack.c.h.b16 %v546
        %v1538 = vunpack.c.l.b16 %v547
        %v1539 = vunpack.c.h.b16 %v547
        %v1540 = vunpack.c.l.b16 %v548
        %v1541 = vunpack.c.h.b16 %v548
        %v1542 = vunpack.c.l.b16 %v549
        %v1543 = vunpack.c.h.b16 %v549
        %v1544 = vunpack.c.l.b16 %v550
        %v1545 = vunpack.c.h.b16 %v550
        %v1546 = vunpack.c.l.b16 %v551
        %v1547 = vunpack.c.h.b16 %v551
        %v1548 = vunpack.c.l.b16 %v552
        %v1549 = vunpack.c.h.b16 %v552
        %v1550 = vunpack.c.l.b16 %v553
        %v1551 = vunpack.c.h.b16 %v553
        %v1552 = vunpack.c.l.b16 %v554
        %v1553 = vunpack.c.h.b16 %v554
        %v1554 = vunpack.c.l.b16 %v555
        %v1555 = vunpack.c.h.b16 %v555
        %v1556 = vunpack.c.l.b16 %v556
        %v1557 = vunpack.c.h.b16 %v556
        %v1558 = vunpack.c.l.b16 %v557
        %v1559 = vunpack.c.h.b16 %v557
        %v1560 = vunpack.c.l.b16 %v558
        %v1561 = vunpack.c.h.b16 %v558
        %v1562 = vunpack.c.l.b16 %v559
        %v1563 = vunpack.c.h.b16 %v559
        %v1564 = vunpack.c.l.b16 %v560
        %v1565 = vunpack.c.h.b16 %v560
        %v1566 = vunpack.c.l.b16 %v561
        %v1567 = vunpack.c.h.b16 %v561
        %v1568 = vunpack.c.l.b16 %v562
        %v1569 = vunpack.c.h.b16 %v562
        %v1570 = vunpack.c.l.b16 %v563
        %v1571 = vunpack.c.h.b16 %v563
        %v1572 = vunpack.c.l.b16 %v564
        %v1573 = vunpack.c.h.b16 %v564
        %v1574 = vunpack.c.l.b16 %v565
        %v1575 = vunpack.c.h.b16 %v565
        %v1576 = vunpack.c.l.b16 %v566
        %v1577 = vunpack.c.h.b16 %v566
        %v1578 = vunpack.c.l.b16 %v567
        %v1579 = vunpack.c.h.b16 %v567
        %v1580 = vunpack.c.l.b16 %v568
        %v1581 = vunpack.c.h.b16 %v568
        %v1582 = vunpack.c.l.b16 %v569
        %v1583 = vunpack.c.h.b16 %v569
        %v1584 = vunpack.c.l.b16 %v570
        %v1585 = vunpack.c.h.b16 %v570
        %v1586 = vunpack.c.l.b16 %v571
        %v1587 = vunpack.c.h.b16 %v571
        %v1588 = vunpack.c.l.b16 %v572
        %v1589 = vunpack.c.h.b16 %v572
        %v1590 = vunpack.c.l.b16 %v573
        %v1591 = vunpack.c.h.b16 %v573
        %v1592 = vunpack.c.l.b16 %v574
        %v1593 = vunpack.c.h.b16 %v574
        %v1594 = vunpack.c.l.b16 %v575
        %v1595 = vunpack.c.h.b16 %v575
        %v1596 = vunpack.c.l.b16 %v576
        %v1597 = vunpack.c.h.b16 %v576
        %v1598 = vunpack.c.l.b16 %v577
        %v1599 = vunpack.c.h.b16 %v577
        %v1600 = vunpack.c.l.b16 %v578
        %v1601 = vunpack.c.h.b16 %v578
        %v1602 = vunpack.c.l.b16 %v579
        %v1603 = vunpack.c.h.b16 %v579
        %v1604 = vunpack.c.l.b16 %v580
        %v1605 = vunpack.c.h.b16 %v580
        %v1606 = vunpack.c.l.b16 %v581
        %v1607 = vunpack.c.h.b16 %v581
        %v1608 = vunpack.c.l.b16 %v582
        %v1609 = vunpack.c.h.b16 %v582
        %v1610 = vunpack.c.l.b16 %v583
        %v1611 = vunpack.c.h.b16 %v583
        %v1612 = vunpack.c.l.b16 %v584
        %v1613 = vunpack.c.h.b16 %v584
        %v1614 = vunpack.c.l.b16 %v585
        %v1615 = vunpack.c.h.b16 %v585
        %v1616 = vunpack.c.l.b16 %v586
        %v1617 = vunpack.c.h.b16 %v586
        %v1618 = vunpack.c.l.b16 %v587
        %v1619 = vunpack.c.h.b16 %v587
        %v1620 = vunpack.c.l.b16 %v588
        %v1621 = vunpack.c.h.b16 %v588
        %v1622 = vunpack.c.l.b16 %v589
        %v1623 = vunpack.c.h.b16 %v589
        %v1624 = vunpack.c.l.b16 %v590
        %v1625 = vunpack.c.h.b16 %v590
        %v1626 = vunpack.c.l.b16 %v591
        %v1627 = vunpack.c.h.b16 %v591
        %v1628 = vunpack.c.l.b16 %v592
        %v1629 = vunpack.c.h.b16 %v592
        %v1630 = vunpack.c.l.b16 %v593
        %v1631 = vunpack.c.h.b16 %v593
        %v1632 = vunpack.c.l.b16 %v594
        %v1633 = vunpack.c.h.b16 %v594
        %v1634 = vunpack.c.l.b16 %v595
        %v1635 = vunpack.c.h.b16 %v595
        %v1636 = vunpack.c.l.b16 %v596
        %v1637 = vunpack.c.h.b16 %v596
        %v1638 = vunpack.c.l.b16 %v597
        %v1639 = vunpack.c.h.b16 %v597
        %v1640 = vunpack.c.l.b16 %v598
        %v1641 = vunpack.c.h.b16 %v598
        %v1642 = vunpack.c.l.b16 %v599
        %v1643 = vunpack.c.h.b16 %v599
        %v1644 = vunpack.c.l.b16 %v600
        %v1645 = vunpack.c.h.b16 %v600
        %v1646 = vunpack.c.l.b16 %v601
        %v1647 = vunpack.c.h.b16 %v601
        %v1648 = vunpack.c.l.b16 %v602
        %v1649 = vunpack.c.h.b16 %v602
        %v1650 = vunpack.c.l.b16 %v603
        %v1651 = vunpack.c.h.b16 %v603
        %v1652 = vunpack.c.l.b16 %v604
        %v1653 = vunpack.c.h.b16 %v604
        %v1654 = vunpack.c.l.b16 %v605
        %v1655 = vunpack.c.h.b16 %v605
        %v1656 = vunpack.c.l.b16 %v606
        %v1657 = vunpack.c.h.b16 %v606
        %v1658 = vunpack.c.l.b16 %v607
        %v1659 = vunpack.c.h.b16 %v607
        %v1660 = vunpack.c.l.b16 %v608
        %v1661 = vunpack.c.h.b16 %v608
        %v1662 = vunpack.c.l.b16 %v609
        %v1663 = vunpack.c.h.b16 %v609
        %v1664 = vunpack.c.l.b16 %v610
        %v1665 = vunpack.c.h.b16 %v610
        %v1666 = vunpack.c.l.b16 %v611
        %v1667 = vunpack.c.h.b16 %v611
        %v1668 = vunpack.c.l.b16 %v612
        %v1669 = vunpack.c.h.b16 %v612
        %v1670 = vunpack.c.l.b16 %v613
        %v1671 = vunpack.c.h.b16 %v613
        %v1672 = vunpack.c.l.b16 %v614
        %v1673 = vunpack.c.h.b16 %v614
        %v1674 = vunpack.c.l.b16 %v615
        %v1675 = vunpack.c.h.b16 %v615
        %v1676 = vunpack.c.l.b16 %v616
        %v1677 = vunpack.c.h.b16 %v616
        %v1678 = vunpack.c.l.b16 %v617
        %v1679 = vunpack.c.h.b16 %v617
        %v1680 = vunpack.c.l.b16 %v618
        %v1681 = vunpack.c.h.b16 %v618
        %v1682 = vunpack.c.l.b16 %v619
        %v1683 = vunpack.c.h.b16 %v619
        %v1684 = vunpack.c.l.b16 %v620
        %v1685 = vunpack.c.h.b16 %v620
        %v1686 = vunpack.c.l.b16 %v621
        %v1687 = vunpack.c.h.b16 %v621
        %v1688 = vunpack.c.l.b16 %v622
        %v1689 = vunpack.c.h.b16 %v622
        %v1690 = vunpack.c.l.b16 %v623
        %v1691 = vunpack.c.h.b16 %v623
        %v1692 = vunpack.c.l.b16 %v624
        %v1693 = vunpack.c.h.b16 %v624
        %v1694 = vunpack.c.l.b16 %v625
        %v1695 = vunpack.c.h.b16 %v625
        %v1696 = vunpack.c.l.b16 %v626
        %v1697 = vunpack.c.h.b16 %v626
        %v1698 = vunpack.c.l.b16 %v627
        %v1699 = vunpack.c.h.b16 %v627
        %v1700 = vunpack.c.l.b16 %v628
        %v1701 = vunpack.c.h.b16 %v628
        %v1702 = vunpack.c.l.b16 %v629
        %v1703 = vunpack.c.h.b16 %v629
        %v1704 = vunpack.c.l.b16 %v630
        %v1705 = vunpack.c.h.b16 %v630
        %v1706 = vunpack.c.l.b16 %v631
        %v1707 = vunpack.c.h.b16 %v631
        %v1708 = vunpack.c.l.b16 %v632
        %v1709 = vunpack.c.h.b16 %v632
        %v1710 = vunpack.c.l.b16 %v633
        %v1711 = vunpack.c.h.b16 %v633
        %v1712 = vunpack.c.l.b16 %v634
        %v1713 = vunpack.c.h.b16 %v634
        %v1714 = vunpack.c.l.b16 %v635
        %v1715 = vunpack.c.h.b16 %v635
        %v1716 = vunpack.c.l.b16 %v636
        %v1717 = vunpack.c.h.b16 %v636
        %v1718 = vunpack.c.l.b16 %v637
        %v1719 = vunpack.c.h.b16 %v637
        %v1720 = vunpack.c.l.b16 %v638
        %v1721 = vunpack.c.h.b16 %v638
        %v1722 = vunpack.c.l.b16 %v639
        %v1723 = vunpack.c.h.b16 %v639
        %v1724 = vunpack.c.l.b16 %v640
        %v1725 = vunpack.c.h.b16 %v640
        %v1726 = vunpack.c.l.b16 %v641
        %v1727 = vunpack.c.h.b16 %v641
        %v1728 = vunpack.c.l.b16 %v642
        %v1729 = vunpack.c.h.b16 %v642
        %v1730 = vunpack.c.l.b16 %v643
        %v1731 = vunpack.c.h.b16 %v643
        %v1732 = vunpack.c.l.b16 %v644
        %v1733 = vunpack.c.h.b16 %v644
        %v1734 = vunpack.c.l.b16 %v645
        %v1735 = vunpack.c.h.b16 %v645
        %v1736 = vunpack.c.l.b16 %v646
        %v1737 = vunpack.c.h.b16 %v646
        %v1738 = vunpack.c.l.b16 %v647
        %v1739 = vunpack.c.h.b16 %v647
        %v1740 = vunpack.c.l.b16 %v648
        %v1741 = vunpack.c.h.b16 %v648
        %v1742 = vunpack.c.l.b16 %v649
        %v1743 = vunpack.c.h.b16 %v649
        %v1744 = vpack.c.b16 %v1236, %v1232
        %v1745 = vpack.c.b16 %v1237, %v1233
        %v1746 = vpack.c.b16 %v1238, %v1234
        %v1747 = vpack.c.b16 %v1239, %v1235
        %v1748 = vpack.c.b16 %v1244, %v1240
        %v1749 = vpack.c.b16 %v1245, %v1241
        %v1750 = vpack.c.b16 %v1246, %v1242
        %v1751 = vpack.c.b16 %v1247, %v1243
        %v1752 = vpack.c.b16 %v1252, %v1248
        %v1753 = vpack.c.b16 %v1253, %v1249
        %v1754 = vpack.c.b16 %v1254, %v1250
        %v1755 = vpack.c.b16 %v1255, %v1251
        %v1756 = vpack.c.b16 %v1260, %v1256
        %v1757 = vpack.c.b16 %v1261, %v1257
        %v1758 = vpack.c.b16 %v1262, %v1258
        %v1759 = vpack.c.b16 %v1263, %v1259
        %v1760 = vpack.c.b16 %v1268, %v1264
        %v1761 = vpack.c.b16 %v1269, %v1265
        %v1762 = vpack.c.b16 %v1270, %v1266
        %v1763 = vpack.c.b16 %v1271, %v1267
        %v1764 = vpack.c.b16 %v1276, %v1272
        %v1765 = vpack.c.b16 %v1277, %v1273
        %v1766 = vpack.c.b16 %v1278, %v1274
        %v1767 = vpack.c.b16 %v1279, %v1275
        %v1768 = vpack.c.b16 %v1284, %v1280
        %v1769 = vpack.c.b16 %v1285, %v1281
        %v1770 = vpack.c.b16 %v1286, %v1282
        %v1771 = vpack.c.b16 %v1287, %v1283
        %v1772 = vpack.c.b16 %v1292, %v1288
        %v1773 = vpack.c.b16 %v1293, %v1289
        %v1774 = vpack.c.b16 %v1294, %v1290
        %v1775 = vpack.c.b16 %v1295, %v1291
        %v1776 = vpack.c.b16 %v1300, %v1296
        %v1777 = vpack.c.b16 %v1301, %v1297
        %v1778 = vpack.c.b16 %v1302, %v1298
        %v1779 = vpack.c.b16 %v1303, %v1299
        %v1780 = vpack.c.b16 %v1308, %v1304
        %v1781 = vpack.c.b16 %v1309, %v1305
        %v1782 = vpack.c.b16 %v1310, %v1306
        %v1783 = vpack.c.b16 %v1311, %v1307
        %v1784 = vpack.c.b16 %v1316, %v1312
        %v1785 = vpack.c.b16 %v1317, %v1313
        %v1786 = vpack.c.b16 %v1318, %v1314
        %v1787 = vpack.c.b16 %v1319, %v1315
        %v1788 = vpack.c.b16 %v1324, %v1320
        %v1789 = vpack.c.b16 %v1325, %v1321
        %v1790 = vpack.c.b16 %v1326, %v1322
        %v1791 = vpack.c.b16 %v1327, %v1323
        %v1792 = vpack.c.b16 %v1332, %v1328
        %v1793 = vpack.c.b16 %v1333, %v1329
        %v1794 = vpack.c.b16 %v1334, %v1330
        %v1795 = vpack.c.b16 %v1335, %v1331
        %v1796 = vpack.c.b16 %v1340, %v1336
        %v1797 = vpack.c.b16 %v1341, %v1337
        %v1798 = vpack.c.b16 %v1342, %v1338
        %v1799 = vpack.c.b16 %v1343, %v1339
        %v1800 = vpack.c.b16 %v1348, %v1344
        %v1801 = vpack.c.b16 %v1349, %v1345
        %v1802 = vpack.c.b16 %v1350, %v1346
        %v1803 = vpack.c.b16 %v1351, %v1347
        %v1804 = vpack.c.b16 %v1356, %v1352
        %v1805 = vpack.c.b16 %v1357, %v1353
        %v1806 = vpack.c.b16 %v1358, %v1354
        %v1807 = vpack.c.b16 %v1359, %v1355
        %v1808 = vpack.c.b16 %v1364, %v1360
        %v1809 = vpack.c.b16 %v1365, %v1361
        %v1810 = vpack.c.b16 %v1366, %v1362
        %v1811 = vpack.c.b16 %v1367, %v1363
        %v1812 = vpack.c.b16 %v1372, %v1368
        %v1813 = vpack.c.b16 %v1373, %v1369
        %v1814 = vpack.c.b16 %v1374, %v1370
        %v1815 = vpack.c.b16 %v1375, %v1371
        %v1816 = vpack.c.b16 %v1380, %v1376
        %v1817 = vpack.c.b16 %v1381, %v1377
        %v1818 = vpack.c.b16 %v1382, %v1378
        %v1819 = vpack.c.b16 %v1383, %v1379
        %v1820 = vpack.c.b16 %v1388, %v1384
        %v1821 = vpack.c.b16 %v1389, %v1385
        %v1822 = vpack.c.b16 %v1390, %v1386
        %v1823 = vpack.c.b16 %v1391, %v1387
        %v1824 = vpack.c.b16 %v1396, %v1392
        %v1825 = vpack.c.b16 %v1397, %v1393
        %v1826 = vpack.c.b16 %v1398, %v1394
        %v1827 = vpack.c.b16 %v1399, %v1395
        %v1828 = vpack.c.b16 %v1404, %v1400
        %v1829 = vpack.c.b16 %v1405, %v1401
        %v1830 = vpack.c.b16 %v1406, %v1402
        %v1831 = vpack.c.b16 %v1407, %v1403
        %v1832 = vpack.c.b16 %v1412, %v1408
        %v1833 = vpack.c.b16 %v1413, %v1409
        %v1834 = vpack.c.b16 %v1414, %v1410
        %v1835 = vpack.c.b16 %v1415, %v1411
        %v1836 = vpack.c.b16 %v1420, %v1416
        %v1837 = vpack.c.b16 %v1421, %v1417
        %v1838 = vpack.c.b16 %v1422, %v1418
        %v1839 = vpack.c.b16 %v1423, %v1419
        %v1840 = vpack.c.b16 %v1428, %v1424
        %v1841 = vpack.c.b16 %v1429, %v1425
        %v1842 = vpack.c.b16 %v1430, %v1426
        %v1843 = vpack.c.b16 %v1431, %v1427
        %v1844 = vpack.c.b16 %v1436, %v1432
        %v1845 = vpack.c.b16 %v1437, %v1433
        %v1846 = vpack.c.b16 %v1438, %v1434
        %v1847 = vpack.c.b16 %v1439, %v1435
        %v1848 = vpack.c.b16 %v1444, %v1440
        %v1849 = vpack.c.b16 %v1445, %v1441
        %v1850 = vpack.c.b16 %v1446, %v1442
        %v1851 = vpack.c.b16 %v1447, %v1443
        %v1852 = vpack.c.b16 %v1452, %v1448
        %v1853 = vpack.c.b16 %v1453, %v1449
        %v1854 = vpack.c.b16 %v1454, %v1450
        %v1855 = vpack.c.b16 %v1455, %v1451
        %v1856 = vpack.c.b16 %v1460, %v1456
        %v1857 = vpack.c.b16 %v1461, %v1457
        %v1858 = vpack.c.b16 %v1462, %v1458
        %v1859 = vpack.c.b16 %v1463, %v1459
        %v1860 = vpack.c.b16 %v1468, %v1464
        %v1861 = vpack.c.b16 %v1469, %v1465
        %v1862 = vpack.c.b16 %v1470, %v1466
        %v1863 = vpack.c.b16 %v1471, %v1467
        %v1864 = vpack.c.b16 %v1476, %v1472
        %v1865 = vpack.c.b16 %v1477, %v1473
        %v1866 = vpack.c.b16 %v1478, %v1474
        %v1867 = vpack.c.b16 %v1479, %v1475
        %v1868 = vpack.c.b16 %v1484, %v1480
        %v1869 = vpack.c.b16 %v1485, %v1481
        %v1870 = vpack.c.b16 %v1486, %v1482
        %v1871 = vpack.c.b16 %v1487, %v1483
        %v1872 = vpack.c.b16 %v1492, %v1488
        %v1873 = vpack.c.b16 %v1493, %v1489
        %v1874 = vpack.c.b16 %v1494, %v1490
        %v1875 = vpack.c.b16 %v1495, %v1491
        %v1876 = vpack.c.b16 %v1500, %v1496
        %v1877 = vpack.c.b16 %v1501, %v1497
        %v1878 = vpack.c.b16 %v1502, %v1498
        %v1879 = vpack.c.b16 %v1503, %v1499
        %v1880 = vpack.c.b16 %v1508, %v1504
        %v1881 = vpack.c.b16 %v1509, %v1505
        %v1882 = vpack.c.b16 %v1510, %v1506
        %v1883 = vpack.c.b16 %v1511, %v1507
        %v1884 = vpack.c.b16 %v1516, %v1512
        %v1885 = vpack.c.b16 %v1517, %v1513
        %v1886 = vpack.c.b16 %v1518, %v1514
        %v1887 = vpack.c.b16 %v1519, %v1515
        %v1888 = vpack.c.b16 %v1524, %v1520
        %v1889 = vpack.c.b16 %v1525, %v1521
        %v1890 = vpack.c.b16 %v1526, %v1522
        %v1891 = vpack.c.b16 %v1527, %v1523
        %v1892 = vpack.c.b16 %v1532, %v1528
        %v1893 = vpack.c.b16 %v1533, %v1529
        %v1894 = vpack.c.b16 %v1534, %v1530
        %v1895 = vpack.c.b16 %v1535, %v1531
        %v1896 = vpack.c.b16 %v1540, %v1536
        %v1897 = vpack.c.b16 %v1541, %v1537
        %v1898 = vpack.c.b16 %v1542, %v1538
        %v1899 = vpack.c.b16 %v1543, %v1539
        %v1900 = vpack.c.b16 %v1548, %v1544
        %v1901 = vpack.c.b16 %v1549, %v1545
        %v1902 = vpack.c.b16 %v1550, %v1546
        %v1903 = vpack.c.b16 %v1551, %v1547
        %v1904 = vpack.c.b16 %v1556, %v1552
        %v1905 = vpack.c.b16 %v1557, %v1553
        %v1906 = vpack.c.b16 %v1558, %v1554
        %v1907 = vpack.c.b16 %v1559, %v1555
        %v1908 = vpack.c.b16 %v1564, %v1560
        %v1909 = vpack.c.b16 %v1565, %v1561
        %v1910 = vpack.c.b16 %v1566, %v1562
        %v1911 = vpack.c.b16 %v1567, %v1563
        %v1912 = vpack.c.b16 %v1572, %v1568
        %v1913 = vpack.c.b16 %v1573, %v1569
        %v1914 = vpack.c.b16 %v1574, %v1570
        %v1915 = vpack.c.b16 %v1575, %v1571
        %v1916 = vpack.c.b16 %v1580, %v1576
        %v1917 = vpack.c.b16 %v1581, %v1577
        %v1918 = vpack.c.b16 %v1582, %v1578
        %v1919 = vpack.c.b16 %v1583, %v1579
        %v1920 = vpack.c.b16 %v1588, %v1584
        %v1921 = vpack.c.b16 %v1589, %v1585
        %v1922 = vpack.c.b16 %v1590, %v1586
        %v1923 = vpack.c.b16 %v1591, %v1587
        %v1924 = vpack.c.b16 %v1596, %v1592
        %v1925 = vpack.c.b16 %v1597, %v1593
        %v1926 = vpack.c.b16 %v1598, %v1594
        %v1927 = vpack.c.b16 %v1599, %v1595
        %v1928 = vpack.c.b16 %v1604, %v1600
        %v1929 = vpack.c.b16 %v1605, %v1601
        %v1930 = vpack.c.b16 %v1606, %v1602
        %v1931 = vpack.c.b16 %v1607, %v1603
        %v1932 = vpack.c.b16 %v1612, %v1608
        %v1933 = vpack.c.b16 %v1613, %v1609
        %v1934 = vpack.c.b16 %v1614, %v1610
        %v1935 = vpack.c.b16 %v1615, %v1611
        %v1936 = vpack.c.b16 %v1620, %v1616
        %v1937 = vpack.c.b16 %v1621, %v1617
        %v1938 = vpack.c.b16 %v1622, %v1618
        %v1939 = vpack.c.b16 %v1623, %v1619
        %v1940 = vpack.c.b16 %v1628, %v1624
        %v1941 = vpack.c.b16 %v1629, %v1625
        %v1942 = vpack.c.b16 %v1630, %v1626
        %v1943 = vpack.c.b16 %v1631, %v1627
        %v1944 = vpack.c.b16 %v1636, %v1632
        %v1945 = vpack.c.b16 %v1637, %v1633
        %v1946 = vpack.c.b16 %v1638, %v1634
        %v1947 = vpack.c.b16 %v1639, %v1635
        %v1948 = vpack.c.b16 %v1644, %v1640
        %v1949 = vpack.c.b16 %v1645, %v1641
        %v1950 = vpack.c.b16 %v1646, %v1642
        %v1951 = vpack.c.b16 %v1647, %v1643
        %v1952 = vpack.c.b16 %v1652, %v1648
        %v1953 = vpack.c.b16 %v1653, %v1649
        %v1954 = vpack.c.b16 %v1654, %v1650
        %v1955 = vpack.c.b16 %v1655, %v1651
        %v1956 = vpack.c.b16 %v1660, %v1656
        %v1957 = vpack.c.b16 %v1661, %v1657
        %v1958 = vpack.c.b16 %v1662, %v1658
        %v1959 = vpack.c.b16 %v1663, %v1659
        %v1960 = vpack.c.b16 %v1668, %v1664
        %v1961 = vpack.c.b16 %v1669, %v1665
        %v1962 = vpack.c.b16 %v1670, %v1666
        %v1963 = vpack.c.b16 %v1671, %v1667
        %v1964 = vpack.c.b16 %v1676, %v1672
        %v1965 = vpack.c.b16 %v1677, %v1673
        %v1966 = vpack.c.b16 %v1678, %v1674
        %v1967 = vpack.c.b16 %v1679, %v1675
        %v1968 = vpack.c.b16 %v1684, %v1680
        %v1969 = vpack.c.b16 %v1685, %v1681
        %v1970 = vpack.c.b16 %v1686, %v1682
        %v1971 = vpack.c.b16 %v1687, %v1683
        %v1972 = vpack.c.b16 %v1692, %v1688
        %v1973 = vpack.c.b16 %v1693, %v1689
        %v1974 = vpack.c.b16 %v1694, %v1690
        %v1975 = vpack.c.b16 %v1695, %v1691
        %v1976 = vpack.c.b16 %v1700, %v1696
        %v1977 = vpack.c.b16 %v1701, %v1697
        %v1978 = vpack.c.b16 %v1702, %v1698
        %v1979 = vpack.c.b16 %v1703, %v1699
        %v1980 = vpack.c.b16 %v1708, %v1704
        %v1981 = vpack.c.b16 %v1709, %v1705
        %v1982 = vpack.c.b16 %v1710, %v1706
        %v1983 = vpack.c.b16 %v1711, %v1707
        %v1984 = vpack.c.b16 %v1716, %v1712
        %v1985 = vpack.c.b16 %v1717, %v1713
        %v1986 = vpack.c.b16 %v1718, %v1714
        %v1987 = vpack.c.b16 %v1719, %v1715
        %v1988 = vpack.c.b16 %v1724, %v1720
        %v1989 = vpack.c.b16 %v1725, %v1721
        %v1990 = vpack.c.b16 %v1726, %v1722
        %v1991 = vpack.c.b16 %v1727, %v1723
        %v1992 = vpack.c.b16 %v1732, %v1728
        %v1993 = vpack.c.b16 %v1733, %v1729
        %v1994 = vpack.c.b16 %v1734, %v1730
        %v1995 = vpack.c.b16 %v1735, %v1731
        %v1996 = vpack.c.b16 %v1740, %v1736
        %v1997 = vpack.c.b16 %v1741, %v1737
        %v1998 = vpack.c.b16 %v1742, %v1738
        %v1999 = vpack.c.b16 %v1743, %v1739
        %2256 = vmatprep.subr.bf16.mxu0 %v1745
        %2257 = vmatpush1.bf16.msra.mxu0 %v1744
        %2258 = vmatprep.subr.bf16.mxu0 %v1749
        %2259 = vmatpush1.bf16.msra.mxu0 %v1748
        %2260 = vmatprep.subr.bf16.mxu0 %v1753
        %2261 = vmatpush1.bf16.msra.mxu0 %v1752
        %2262 = vmatprep.subr.bf16.mxu0 %v1757
        %2263 = vmatpush1.bf16.msra.mxu0 %v1756
        %2264 = vmatprep.subr.bf16.mxu0 %v1761
        %2265 = vmatpush1.bf16.msra.mxu0 %v1760
        %2266 = vmatprep.subr.bf16.mxu0 %v1765
        %2267 = vmatpush1.bf16.msra.mxu0 %v1764
        %2268 = vmatprep.subr.bf16.mxu0 %v1769
        %2269 = vmatpush1.bf16.msra.mxu0 %v1768
        %2270 = vmatprep.subr.bf16.mxu0 %v1773
        %2271 = vmatpush1.bf16.msra.mxu0 %v1772
        %2272 = vmatprep.subr.bf16.mxu0 %v1777
        %2273 = vmatpush1.bf16.msra.mxu0 %v1776
        %2274 = vmatprep.subr.bf16.mxu0 %v1781
        %2275 = vmatpush1.bf16.msra.mxu0 %v1780
        %2276 = vmatprep.subr.bf16.mxu0 %v1785
        %2277 = vmatpush1.bf16.msra.mxu0 %v1784
        %2278 = vmatprep.subr.bf16.mxu0 %v1789
        %2279 = vmatpush1.bf16.msra.mxu0 %v1788
        %2280 = vmatprep.subr.bf16.mxu0 %v1793
        %2281 = vmatpush1.bf16.msra.mxu0 %v1792
        %2282 = vmatprep.subr.bf16.mxu0 %v1797
        %2283 = vmatpush1.bf16.msra.mxu0 %v1796
        %2284 = vmatprep.subr.bf16.mxu0 %v1801
        %2285 = vmatpush1.bf16.msra.mxu0 %v1800
        %2286 = vmatprep.subr.bf16.mxu0 %v1805
        %2287 = vmatpush1.bf16.msra.mxu0 %v1804
        %2288 = vmatprep.mubr.bf16.mxu0 %v961
        %2289 = vmatmul.mubr.bf16.gmra.mrb[0].mxu0 %v960
        %v2290 = vpop.f32.mrb[0].mxu0
        %v2291 = vadd.f32 %v885, %v2290
        %v2292 = vpop.f32.mrb[0].mxu0
        %v2293 = vadd.f32 %v887, %v2292
        %v2294 = vpop.f32.mrb[0].mxu0
        %v2295 = vadd.f32 %v889, %v2294
        %v2296 = vpop.f32.mrb[0].mxu0
        %v2297 = vadd.f32 %v891, %v2296
        %2298 = vdwg.mxu0
        %2299 = vmatprep.subr.bf16.mxu0 %v1809
        %2300 = vmatpush1.bf16.msra.mxu0 %v1808
        %2301 = vmatprep.subr.bf16.mxu0 %v1813
        %2302 = vmatpush1.bf16.msra.mxu0 %v1812
        %2303 = vmatprep.subr.bf16.mxu0 %v1817
        %2304 = vmatpush1.bf16.msra.mxu0 %v1816
        %2305 = vmatprep.subr.bf16.mxu0 %v1821
        %2306 = vmatpush1.bf16.msra.mxu0 %v1820
        %2307 = vmatprep.subr.bf16.mxu0 %v1825
        %2308 = vmatpush1.bf16.msra.mxu0 %v1824
        %2309 = vmatprep.subr.bf16.mxu0 %v1829
        %2310 = vmatpush1.bf16.msra.mxu0 %v1828
        %2311 = vmatprep.subr.bf16.mxu0 %v1833
        %2312 = vmatpush1.bf16.msra.mxu0 %v1832
        %2313 = vmatprep.subr.bf16.mxu0 %v1837
        %2314 = vmatpush1.bf16.msra.mxu0 %v1836
        %2315 = vmatprep.subr.bf16.mxu0 %v1841
        %2316 = vmatpush1.bf16.msra.mxu0 %v1840
        %2317 = vmatprep.subr.bf16.mxu0 %v1845
        %2318 = vmatpush1.bf16.msra.mxu0 %v1844
        %2319 = vmatprep.subr.bf16.mxu0 %v1849
        %2320 = vmatpush1.bf16.msra.mxu0 %v1848
        %2321 = vmatprep.subr.bf16.mxu0 %v1853
        %2322 = vmatpush1.bf16.msra.mxu0 %v1852
        %2323 = vmatprep.subr.bf16.mxu0 %v1857
        %2324 = vmatpush1.bf16.msra.mxu0 %v1856
        %2325 = vmatprep.subr.bf16.mxu0 %v1861
        %2326 = vmatpush1.bf16.msra.mxu0 %v1860
        %2327 = vmatprep.subr.bf16.mxu0 %v1865
        %2328 = vmatpush1.bf16.msra.mxu0 %v1864
        %2329 = vmatprep.subr.bf16.mxu0 %v1869
        %2330 = vmatpush1.bf16.msra.mxu0 %v1868
        %2331 = vmatprep.mubr.bf16.mxu0 %v963
        %2332 = vmatmul.mubr.bf16.gmra.mrb[0].mxu0 %v962
        %v2333 = vpop.f32.mrb[0].mxu0
        %v2334 = vadd.f32 %v2291, %v2333
        %v2335 = vpop.f32.mrb[0].mxu0
        %v2336 = vadd.f32 %v2293, %v2335
        %v2337 = vpop.f32.mrb[0].mxu0
        %v2338 = vadd.f32 %v2295, %v2337
        %v2339 = vpop.f32.mrb[0].mxu0
        %v2340 = vadd.f32 %v2297, %v2339
        %2341 = vdwg.mxu0
        %2342 = vmatprep.subr.bf16.mxu0 %v1873
        %2343 = vmatpush1.bf16.msra.mxu0 %v1872
        %2344 = vmatprep.subr.bf16.mxu0 %v1877
        %2345 = vmatpush1.bf16.msra.mxu0 %v1876
        %2346 = vmatprep.subr.bf16.mxu0 %v1881
        %2347 = vmatpush1.bf16.msra.mxu0 %v1880
        %2348 = vmatprep.subr.bf16.mxu0 %v1885
        %2349 = vmatpush1.bf16.msra.mxu0 %v1884
        %2350 = vmatprep.subr.bf16.mxu0 %v1889
        %2351 = vmatpush1.bf16.msra.mxu0 %v1888
        %2352 = vmatprep.subr.bf16.mxu0 %v1893
        %2353 = vmatpush1.bf16.msra.mxu0 %v1892
        %2354 = vmatprep.subr.bf16.mxu0 %v1897
        %2355 = vmatpush1.bf16.msra.mxu0 %v1896
        %2356 = vmatprep.subr.bf16.mxu0 %v1901
        %2357 = vmatpush1.bf16.msra.mxu0 %v1900
        %2358 = vmatprep.subr.bf16.mxu0 %v1905
        %2359 = vmatpush1.bf16.msra.mxu0 %v1904
        %2360 = vmatprep.subr.bf16.mxu0 %v1909
        %2361 = vmatpush1.bf16.msra.mxu0 %v1908
        %2362 = vmatprep.subr.bf16.mxu0 %v1913
        %2363 = vmatpush1.bf16.msra.mxu0 %v1912
        %2364 = vmatprep.subr.bf16.mxu0 %v1917
        %2365 = vmatpush1.bf16.msra.mxu0 %v1916
        %2366 = vmatprep.subr.bf16.mxu0 %v1921
        %2367 = vmatpush1.bf16.msra.mxu0 %v1920
        %2368 = vmatprep.subr.bf16.mxu0 %v1925
        %2369 = vmatpush1.bf16.msra.mxu0 %v1924
        %2370 = vmatprep.subr.bf16.mxu0 %v1929
        %2371 = vmatpush1.bf16.msra.mxu0 %v1928
        %2372 = vmatprep.subr.bf16.mxu0 %v1933
        %2373 = vmatpush1.bf16.msra.mxu0 %v1932
        %2374 = vmatprep.mubr.bf16.mxu0 %v965
        %2375 = vmatmul.mubr.bf16.gmra.mrb[0].mxu0 %v964
        %v2376 = vpop.f32.mrb[0].mxu0
        %v2377 = vadd.f32 %v2334, %v2376
        %v2378 = vpop.f32.mrb[0].mxu0
        %v2379 = vadd.f32 %v2336, %v2378
        %v2380 = vpop.f32.mrb[0].mxu0
        %v2381 = vadd.f32 %v2338, %v2380
        %v2382 = vpop.f32.mrb[0].mxu0
        %v2383 = vadd.f32 %v2340, %v2382
        %2384 = vdwg.mxu0
        %2385 = vmatprep.subr.bf16.mxu0 %v1937
        %2386 = vmatpush1.bf16.msra.mxu0 %v1936
        %2387 = vmatprep.subr.bf16.mxu0 %v1941
        %2388 = vmatpush1.bf16.msra.mxu0 %v1940
        %2389 = vmatprep.subr.bf16.mxu0 %v1945
        %2390 = vmatpush1.bf16.msra.mxu0 %v1944
        %2391 = vmatprep.subr.bf16.mxu0 %v1949
        %2392 = vmatpush1.bf16.msra.mxu0 %v1948
        %2393 = vmatprep.subr.bf16.mxu0 %v1953
        %2394 = vmatpush1.bf16.msra.mxu0 %v1952
        %2395 = vmatprep.subr.bf16.mxu0 %v1957
        %2396 = vmatpush1.bf16.msra.mxu0 %v1956
        %2397 = vmatprep.subr.bf16.mxu0 %v1961
        %2398 = vmatpush1.bf16.msra.mxu0 %v1960
        %2399 = vmatprep.subr.bf16.mxu0 %v1965
        %2400 = vmatpush1.bf16.msra.mxu0 %v1964
        %2401 = vmatprep.subr.bf16.mxu0 %v1969
        %2402 = vmatpush1.bf16.msra.mxu0 %v1968
        %2403 = vmatprep.subr.bf16.mxu0 %v1973
        %2404 = vmatpush1.bf16.msra.mxu0 %v1972
        %2405 = vmatprep.subr.bf16.mxu0 %v1977
        %2406 = vmatpush1.bf16.msra.mxu0 %v1976
        %2407 = vmatprep.subr.bf16.mxu0 %v1981
        %2408 = vmatpush1.bf16.msra.mxu0 %v1980
        %2409 = vmatprep.subr.bf16.mxu0 %v1985
        %2410 = vmatpush1.bf16.msra.mxu0 %v1984
        %2411 = vmatprep.subr.bf16.mxu0 %v1989
        %2412 = vmatpush1.bf16.msra.mxu0 %v1988
        %2413 = vmatprep.subr.bf16.mxu0 %v1993
        %2414 = vmatpush1.bf16.msra.mxu0 %v1992
        %2415 = vmatprep.subr.bf16.mxu0 %v1997
        %2416 = vmatpush1.bf16.msra.mxu0 %v1996
        %2417 = vmatprep.mubr.bf16.mxu0 %v967
        %2418 = vmatmul.mubr.bf16.gmra.mrb[0].mxu0 %v966
        %v2419 = vpop.f32.mrb[0].mxu0
        %v2420 = vadd.f32 %v2377, %v2419
        %v2421 = vpop.f32.mrb[0].mxu0
        %v2422 = vadd.f32 %v2379, %v2421
        %v2423 = vpop.f32.mrb[0].mxu0
        %v2424 = vadd.f32 %v2381, %v2423
        %v2425 = vpop.f32.mrb[0].mxu0
        %v2426 = vadd.f32 %v2383, %v2425
        %2427 = vdwg.mxu0
        %2428 = vmatprep.subr.bf16.mxu0 %v1747
        %2429 = vmatpush1.bf16.msra.mxu0 %v1746
        %2430 = vmatprep.subr.bf16.mxu0 %v1751
        %2431 = vmatpush1.bf16.msra.mxu0 %v1750
        %2432 = vmatprep.subr.bf16.mxu0 %v1755
        %2433 = vmatpush1.bf16.msra.mxu0 %v1754
        %2434 = vmatprep.subr.bf16.mxu0 %v1759
        %2435 = vmatpush1.bf16.msra.mxu0 %v1758
        %2436 = vmatprep.subr.bf16.mxu0 %v1763
        %2437 = vmatpush1.bf16.msra.mxu0 %v1762
        %2438 = vmatprep.subr.bf16.mxu0 %v1767
        %2439 = vmatpush1.bf16.msra.mxu0 %v1766
        %2440 = vmatprep.subr.bf16.mxu0 %v1771
        %2441 = vmatpush1.bf16.msra.mxu0 %v1770
        %2442 = vmatprep.subr.bf16.mxu0 %v1775
        %2443 = vmatpush1.bf16.msra.mxu0 %v1774
        %2444 = vmatprep.subr.bf16.mxu0 %v1779
        %2445 = vmatpush1.bf16.msra.mxu0 %v1778
        %2446 = vmatprep.subr.bf16.mxu0 %v1783
        %2447 = vmatpush1.bf16.msra.mxu0 %v1782
        %2448 = vmatprep.subr.bf16.mxu0 %v1787
        %2449 = vmatpush1.bf16.msra.mxu0 %v1786
        %2450 = vmatprep.subr.bf16.mxu0 %v1791
        %2451 = vmatpush1.bf16.msra.mxu0 %v1790
        %2452 = vmatprep.subr.bf16.mxu0 %v1795
        %2453 = vmatpush1.bf16.msra.mxu0 %v1794
        %2454 = vmatprep.subr.bf16.mxu0 %v1799
        %2455 = vmatpush1.bf16.msra.mxu0 %v1798
        %2456 = vmatprep.subr.bf16.mxu0 %v1803
        %2457 = vmatpush1.bf16.msra.mxu0 %v1802
        %2458 = vmatprep.subr.bf16.mxu0 %v1807
        %2459 = vmatpush1.bf16.msra.mxu0 %v1806
        %2460 = vmatprep.mubr.bf16.mxu0 %v961
        %2461 = vmatmul.mubr.bf16.gmra.mrb[0].mxu0 %v960
        %v2462 = vpop.f32.mrb[0].mxu0
        %v2463 = vadd.f32 %v928, %v2462
        %v2464 = vpop.f32.mrb[0].mxu0
        %v2465 = vadd.f32 %v930, %v2464
        %v2466 = vpop.f32.mrb[0].mxu0
        %v2467 = vadd.f32 %v932, %v2466
        %v2468 = vpop.f32.mrb[0].mxu0
        %v2469 = vadd.f32 %v934, %v2468
        %2470 = vdwg.mxu0
        %2471 = vmatprep.subr.bf16.mxu0 %v1811
        %2472 = vmatpush1.bf16.msra.mxu0 %v1810
        %2473 = vmatprep.subr.bf16.mxu0 %v1815
        %2474 = vmatpush1.bf16.msra.mxu0 %v1814
        %2475 = vmatprep.subr.bf16.mxu0 %v1819
        %2476 = vmatpush1.bf16.msra.mxu0 %v1818
        %2477 = vmatprep.subr.bf16.mxu0 %v1823
        %2478 = vmatpush1.bf16.msra.mxu0 %v1822
        %2479 = vmatprep.subr.bf16.mxu0 %v1827
        %2480 = vmatpush1.bf16.msra.mxu0 %v1826
        %2481 = vmatprep.subr.bf16.mxu0 %v1831
        %2482 = vmatpush1.bf16.msra.mxu0 %v1830
        %2483 = vmatprep.subr.bf16.mxu0 %v1835
        %2484 = vmatpush1.bf16.msra.mxu0 %v1834
        %2485 = vmatprep.subr.bf16.mxu0 %v1839
        %2486 = vmatpush1.bf16.msra.mxu0 %v1838
        %2487 = vmatprep.subr.bf16.mxu0 %v1843
        %2488 = vmatpush1.bf16.msra.mxu0 %v1842
        %2489 = vmatprep.subr.bf16.mxu0 %v1847
        %2490 = vmatpush1.bf16.msra.mxu0 %v1846
        %2491 = vmatprep.subr.bf16.mxu0 %v1851
        %2492 = vmatpush1.bf16.msra.mxu0 %v1850
        %2493 = vmatprep.subr.bf16.mxu0 %v1855
        %2494 = vmatpush1.bf16.msra.mxu0 %v1854
        %2495 = vmatprep.subr.bf16.mxu0 %v1859
        %2496 = vmatpush1.bf16.msra.mxu0 %v1858
        %2497 = vmatprep.subr.bf16.mxu0 %v1863
        %2498 = vmatpush1.bf16.msra.mxu0 %v1862
        %2499 = vmatprep.subr.bf16.mxu0 %v1867
        %2500 = vmatpush1.bf16.msra.mxu0 %v1866
        %2501 = vmatprep.subr.bf16.mxu0 %v1871
        %2502 = vmatpush1.bf16.msra.mxu0 %v1870
        %2503 = vmatprep.mubr.bf16.mxu0 %v963
        %2504 = vmatmul.mubr.bf16.gmra.mrb[0].mxu0 %v962
        %v2505 = vpop.f32.mrb[0].mxu0
        %v2506 = vadd.f32 %v2463, %v2505
        %v2507 = vpop.f32.mrb[0].mxu0
        %v2508 = vadd.f32 %v2465, %v2507
        %v2509 = vpop.f32.mrb[0].mxu0
        %v2510 = vadd.f32 %v2467, %v2509
        %v2511 = vpop.f32.mrb[0].mxu0
        %v2512 = vadd.f32 %v2469, %v2511
        %2513 = vdwg.mxu0
        %2514 = vmatprep.subr.bf16.mxu0 %v1875
        %2515 = vmatpush1.bf16.msra.mxu0 %v1874
        %2516 = vmatprep.subr.bf16.mxu0 %v1879
        %2517 = vmatpush1.bf16.msra.mxu0 %v1878
        %2518 = vmatprep.subr.bf16.mxu0 %v1883
        %2519 = vmatpush1.bf16.msra.mxu0 %v1882
        %2520 = vmatprep.subr.bf16.mxu0 %v1887
        %2521 = vmatpush1.bf16.msra.mxu0 %v1886
        %2522 = vmatprep.subr.bf16.mxu0 %v1891
        %2523 = vmatpush1.bf16.msra.mxu0 %v1890
        %2524 = vmatprep.subr.bf16.mxu0 %v1895
        %2525 = vmatpush1.bf16.msra.mxu0 %v1894
        %2526 = vmatprep.subr.bf16.mxu0 %v1899
        %2527 = vmatpush1.bf16.msra.mxu0 %v1898
        %2528 = vmatprep.subr.bf16.mxu0 %v1903
        %2529 = vmatpush1.bf16.msra.mxu0 %v1902
        %2530 = vmatprep.subr.bf16.mxu0 %v1907
        %2531 = vmatpush1.bf16.msra.mxu0 %v1906
        %2532 = vmatprep.subr.bf16.mxu0 %v1911
        %2533 = vmatpush1.bf16.msra.mxu0 %v1910
        %2534 = vmatprep.subr.bf16.mxu0 %v1915
        %2535 = vmatpush1.bf16.msra.mxu0 %v1914
        %2536 = vmatprep.subr.bf16.mxu0 %v1919
        %2537 = vmatpush1.bf16.msra.mxu0 %v1918
        %2538 = vmatprep.subr.bf16.mxu0 %v1923
        %2539 = vmatpush1.bf16.msra.mxu0 %v1922
        %2540 = vmatprep.subr.bf16.mxu0 %v1927
        %2541 = vmatpush1.bf16.msra.mxu0 %v1926
        %2542 = vmatprep.subr.bf16.mxu0 %v1931
        %2543 = vmatpush1.bf16.msra.mxu0 %v1930
        %2544 = vmatprep.subr.bf16.mxu0 %v1935
        %2545 = vmatpush1.bf16.msra.mxu0 %v1934
        %2546 = vmatprep.mubr.bf16.mxu0 %v965
        %2547 = vmatmul.mubr.bf16.gmra.mrb[0].mxu0 %v964
        %v2548 = vpop.f32.mrb[0].mxu0
        %v2549 = vadd.f32 %v2506, %v2548
        %v2550 = vpop.f32.mrb[0].mxu0
        %v2551 = vadd.f32 %v2508, %v2550
        %v2552 = vpop.f32.mrb[0].mxu0
        %v2553 = vadd.f32 %v2510, %v2552
        %v2554 = vpop.f32.mrb[0].mxu0
        %v2555 = vadd.f32 %v2512, %v2554
        %2556 = vdwg.mxu0
        %2557 = vmatprep.subr.bf16.mxu0 %v1939
        %2558 = vmatpush1.bf16.msra.mxu0 %v1938
        %2559 = vmatprep.subr.bf16.mxu0 %v1943
        %2560 = vmatpush1.bf16.msra.mxu0 %v1942
        %2561 = vmatprep.subr.bf16.mxu0 %v1947
        %2562 = vmatpush1.bf16.msra.mxu0 %v1946
        %2563 = vmatprep.subr.bf16.mxu0 %v1951
        %2564 = vmatpush1.bf16.msra.mxu0 %v1950
        %2565 = vmatprep.subr.bf16.mxu0 %v1955
        %2566 = vmatpush1.bf16.msra.mxu0 %v1954
        %2567 = vmatprep.subr.bf16.mxu0 %v1959
        %2568 = vmatpush1.bf16.msra.mxu0 %v1958
        %2569 = vmatprep.subr.bf16.mxu0 %v1963
        %2570 = vmatpush1.bf16.msra.mxu0 %v1962
        %2571 = vmatprep.subr.bf16.mxu0 %v1967
        %2572 = vmatpush1.bf16.msra.mxu0 %v1966
        %2573 = vmatprep.subr.bf16.mxu0 %v1971
        %2574 = vmatpush1.bf16.msra.mxu0 %v1970
        %2575 = vmatprep.subr.bf16.mxu0 %v1975
        %2576 = vmatpush1.bf16.msra.mxu0 %v1974
        %2577 = vmatprep.subr.bf16.mxu0 %v1979
        %2578 = vmatpush1.bf16.msra.mxu0 %v1978
        %2579 = vmatprep.subr.bf16.mxu0 %v1983
        %2580 = vmatpush1.bf16.msra.mxu0 %v1982
        %2581 = vmatprep.subr.bf16.mxu0 %v1987
        %2582 = vmatpush1.bf16.msra.mxu0 %v1986
        %2583 = vmatprep.subr.bf16.mxu0 %v1991
        %2584 = vmatpush1.bf16.msra.mxu0 %v1990
        %2585 = vmatprep.subr.bf16.mxu0 %v1995
        %2586 = vmatpush1.bf16.msra.mxu0 %v1994
        %2587 = vmatprep.subr.bf16.mxu0 %v1999
        %2588 = vmatpush1.bf16.msra.mxu0 %v1998
        %2589 = vmatprep.mubr.bf16.mxu0 %v967
        %2590 = vmatmul.mubr.bf16.gmra.mrb[0].mxu0 %v966
        %v2591 = vpop.f32.mrb[0].mxu0
        %v2592 = vadd.f32 %v2549, %v2591
        %v2593 = vpop.f32.mrb[0].mxu0
        %v2594 = vadd.f32 %v2551, %v2593
        %v2595 = vpop.f32.mrb[0].mxu0
        %v2596 = vadd.f32 %v2553, %v2595
        %v2597 = vpop.f32.mrb[0].mxu0
        %v2598 = vadd.f32 %v2555, %v2597
        %2599 = vdwg.mxu0
        %v2600 = vld [vmem:[%s341] sm:$0xf]
        %v2602 = vlaneseq
        %v2603 = vshrl.u32 %v2602, 7
        %v2604 = vsub.s32 0, %v2603
        %v2605 = vrot.slane %v2600, %v2604
        %v2606 = vlaneseq
        %v2607 = vshrl.u32 %v2606, 7
        %v2608 = vsub.s32 1, %v2607
        %v2609 = vrot.slane %v2600, %v2608
        %v2610 = vlaneseq
        %v2611 = vshrl.u32 %v2610, 7
        %v2612 = vsub.s32 2, %v2611
        %v2613 = vrot.slane %v2600, %v2612
        %v2614 = vlaneseq
        %v2615 = vshrl.u32 %v2614, 7
        %v2616 = vsub.s32 3, %v2615
        %v2617 = vrot.slane %v2600, %v2616
        %v2622 = vadd.f32 %v2420, %v2605
        %v2623 = vadd.f32 %v2422, %v2609
        %v2624 = vadd.f32 %v2592, %v2613
        %v2625 = vadd.f32 %v2594, %v2617
        %v2626 = vadd.f32 %v2424, %v2605
        %v2627 = vadd.f32 %v2426, %v2609
        %v2628 = vadd.f32 %v2596, %v2613
        %v2629 = vadd.f32 %v2598, %v2617
        %v2630 = vpack.c.bf16 %v2626, %v2622
        %v2631 = vpack.c.bf16 %v2627, %v2623
        %v2632 = vpack.c.bf16 %v2628, %v2624
        %v2633 = vpack.c.bf16 %v2629, %v2625
        %v2638 = vunpack.c.l.b16 %v2630
        %v2639 = vunpack.c.l.b16 %v2631
        %v2640 = vunpack.c.l.b16 %v2632
        %v2641 = vunpack.c.l.b16 %v2633
        %v2642 = vunpack.c.h.b16 %v2630
        %v2643 = vunpack.c.h.b16 %v2631
        %v2644 = vunpack.c.h.b16 %v2632
        %v2645 = vunpack.c.h.b16 %v2633
        %v2646 = vpack.c.b16 %v2639, %v2638
        %v2647 = vpack.c.b16 %v2641, %v2640
        %v2648 = vpack.c.b16 %v2643, %v2642
        %v2649 = vpack.c.b16 %v2645, %v2644
        %2654 = vst [vmem:[%s377] sm:$0xff] %v2646
        %2655 = vst [vmem:[%s377 + $0x8] sm:$0xff] %v2647
        %2656 = vst [vmem:[%s377 + $0x10] sm:$0xff] %v2648
        %2657 = vst [vmem:[%s377 + $0x18] sm:$0xff] %v2649
        %s2658 = sand.u32 %s178, 1
        %s2659 = scalar_lea.sflag [#allocation4], %s2658
        %s2660 = sand.u32 %s178, 1
        %s2661 = smul.addr %s2660, 32
        %s2662 = scalar_lea.vmem [#allocation11], %s2661
        // Predicated region
        $region61: #{tpu_custom_call.1} parent=39 // pred_check
          %p2663 = pneg %p188
        $region62: #{tpu_custom_call.1} parent=39 // pred_check_branch
          %2665 = sbr.rel (%p2663) target = $region64
        $region63: #{tpu_custom_call.1} parent=39 // pred_region
          %s2666 = smul.u32 2, %s30
          %s2667 = smul.u32 4, %s31
          %s2669 = ssub.s32 512, 512
          %2670 = vsyncadd %s2659, %s2669
          %s2671 = smul.addr %s2666, 8
          %s2672 = sadd.s32 %s2667, %s2671
          %s2673 = smul.addr %s2672, 64
          %s2674 = scalar_lea.hbm %s5, %s2673
          %s2675 = sshll.u32 %s2662, 4
          %s2676 = int_to_ptr.vmem [resolvable:$true] %s2675
          %2681 = dma.vmem_to_hbm [thread:$0]  %s2676, 512, %s2674, %s2659, 256, 512, 16
        $region64: #{tpu_custom_call.1} parent=39 // pred_fallthru
          _
      $region40: #{tpu_custom_call.1} parent=5 // pred_fallthru
        _
      %p2682 = scmp.le.s32.totalorder 2, %s21
      // Predicated region
      $region65: #{tpu_custom_call.1} parent=5 // pred_check
        %p2683 = pneg %p2682
      $region66: #{tpu_custom_call.1} parent=5 // pred_check_branch
        %2685 = sbr.rel (%p2683) target = $region68
      $region67: #{tpu_custom_call.1} parent=5 // pred_region
        %s2686 = ssub.s32 %s21, 2
        // Predicated region
        $region69: #{tpu_custom_call.1} parent=67 // pred_check
          %p2687 = pneg %p194
        $region70: #{tpu_custom_call.1} parent=67 // pred_check_branch
          %2689 = sbr.rel (%p2687) target = $region72
        $region71: #{tpu_custom_call.1} parent=67 // pred_region
          %s2690 = sand.u32 %s179, 1
          %s2691 = scalar_lea.sflag [#allocation4], %s2690
          %s2692 = sand.u32 %s179, 1
          %s2693 = smul.addr %s2692, 32
          %s2694 = scalar_lea.vmem [#allocation11], %s2693
          %2695 = dma.done %s2691, 512
        $region72: #{tpu_custom_call.1} parent=67 // pred_fallthru
          _
      $region68: #{tpu_custom_call.1} parent=5 // pred_fallthru
        _
    $region6: #{tpu_custom_call.1} parent=1 // loop_footer
      %s25 = sadd.s32 1, %s21
    $region7: #{tpu_custom_call.1} parent=1 // loop_footer_branch
      %20 = sbr.rel target = $region3
    $region8: #{tpu_custom_call.1} parent=1 // loop_exit
      _
    %2696 = vsyncpa [#allocation3], 1
    %s2697 = scalar_lea.sflag [#allocation3], 1
    %2698 = vsyncpa %s2697, 1
    %2699 = vsyncpa [#allocation6], 1
    %s2700 = scalar_lea.sflag [#allocation6], 1
    %2701 = vsyncpa %s2700, 1
    %2702 = vsyncpa [#allocation9], 1
    %s2703 = scalar_lea.sflag [#allocation9], 1
    %2704 = vsyncpa %s2703, 1
    %2705 = vsyncpa [#allocation4], 1
    %s2706 = scalar_lea.sflag [#allocation4], 1
    %2707 = vsyncpa %s2706, 1

</llo_original>
